<compile_context>
chip_gen: v7x
topology: tpu7x:2x2x1
jax: 0.10.0
libtpu: 0.0.40
codegen_flags: <defaults>
</compile_context>

<pallas_src>
import functools

import jax
import jax.numpy as jnp
from jax.experimental import pallas as pl
from jax.experimental.pallas import tpu as pltpu

_LANE = 128                      # pad N and K to multiples of the lane width
_TM_MAX = 512                    # M-tile rows; 512x512 f32 A-tile ~= 1 MiB
_VMEM_LIMIT = 48 * 1024 * 1024   # headroom under v7x's 64 MiB physical VMEM


def _round_up(x, m):
    return (x + m - 1) // m * m


# ----------------------------- Pallas kernels ------------------------------

def _conv_pool_kernel(a0_ref, a1_ref, a2_ref, a3_ref, w_ref, b_ref, o_ref):
    # Fused conv-as-matmul + 2x2 max-pool + bias + ReLU.
    # a_p: [TM, Kp] im2col patches for pool position p; w: [Kp, Np]; b: [1, Np].
    w = w_ref[...]
    y0 = jnp.dot(a0_ref[...], w, preferred_element_type=jnp.float32)
    y1 = jnp.dot(a1_ref[...], w, preferred_element_type=jnp.float32)
    y2 = jnp.dot(a2_ref[...], w, preferred_element_type=jnp.float32)
    y3 = jnp.dot(a3_ref[...], w, preferred_element_type=jnp.float32)
    # max-pool commutes with (+bias, ReLU): max_p relu(y_p + b) == relu(max_p y_p + b)
    acc = jnp.maximum(jnp.maximum(y0, y1), jnp.maximum(y2, y3))
    o_ref[...] = jnp.maximum(acc + b_ref[...], 0.0).astype(o_ref.dtype)


def _matmul_bias_kernel(a_ref, w_ref, b_ref, o_ref, *, apply_relu):
    acc = jnp.dot(a_ref[...], w_ref[...], preferred_element_type=jnp.float32)
    acc = acc + b_ref[...]
    if apply_relu:
        acc = jnp.maximum(acc, 0.0)
    o_ref[...] = acc.astype(o_ref.dtype)


def _m_tiling(m):
    # Pick an M tile (multiple of 8), grid size and padded M.
    m8 = _round_up(max(m, 1), 8)
    tm = min(_TM_MAX, m8)
    grid_m = pl.cdiv(m8, tm)
    return tm, grid_m, grid_m * tm


_COMPILER_PARAMS = pltpu.CompilerParams(
    dimension_semantics=("parallel",),
    vmem_limit_bytes=_VMEM_LIMIT,
)


# --------------------------- layer wrappers ---------------------------------

def _im2col_pool_views(x_nhwc, kh, kw):
    # Patches for each of the 4 positions of every 2x2 pooling window.
    # Row m = b*PH*PW + oh*PW + ow of view (pi, pj) is the flattened kh x kw
    # input patch feeding conv-output pixel (2*oh+pi, 2*ow+pj) of image b.
    B, H, W, C = x_nhwc.shape
    OH, OW = H - kh + 1, W - kw + 1
    PH, PW = OH // 2, OW // 2
    views = []
    for pi in (0, 1):
        for pj in (0, 1):
            cols = [x_nhwc[:, pi + ki: pi + ki + 2 * PH: 2,
                           pj + kj: pj + kj + 2 * PW: 2, :]
                    for ki in range(kh) for kj in range(kw)]
            patches = jnp.stack(cols, axis=3)            # [B, PH, PW, kh*kw, C]
            views.append(patches.reshape(B * PH * PW, kh * kw * C))
    return views, (B, PH, PW)


def conv5x5_relu_pool2(x_nhwc, w_mat, b_pad, out_channels, *, kh=5, kw=5):
    """Fused valid conv (kh x kw) + bias + ReLU + 2x2 max-pool, NHWC in/out."""
    # TODO(synk): the im2col patch matrices are still materialized by XLA in
    # HBM; a fully in-kernel patch build (manual DMA of input row-bands) would
    # cut the conv input stream ~25x at large batch.
    views, (B, PH, PW) = _im2col_pool_views(x_nhwc, kh, kw)
    K = kh * kw * x_nhwc.shape[-1]
    Kp, Np = w_mat.shape
    M = B * PH * PW
    TM, grid_m, Mp = _m_tiling(M)
    views = [jnp.pad(v, ((0, Mp - M), (0, Kp - K))) for v in views]

    a_spec = pl.BlockSpec((TM, Kp), lambda i: (i, 0))
    out = pl.pallas_call(
        _conv_pool_kernel,
        out_shape=jax.ShapeDtypeStruct((Mp, Np), jnp.float32),
        grid=(grid_m,),
        in_specs=[a_spec, a_spec, a_spec, a_spec,
                  pl.BlockSpec((Kp, Np), lambda i: (0, 0)),
                  pl.BlockSpec((1, Np), lambda i: (0, 0))],
        out_specs=pl.BlockSpec((TM, Np), lambda i: (i, 0)),
        compiler_params=_COMPILER_PARAMS,
    )(*views, w_mat, b_pad)
    return out[:M, :out_channels].reshape(B, PH, PW, out_channels)


def matmul_bias(a, w_mat, b_pad, out_features, *, apply_relu):
    """a[M, K] @ w_mat[Kp, Np] + b (N padded lane-dense); returns [M, out_features]."""
    M, K = a.shape
    Kp, Np = w_mat.shape
    TM, grid_m, Mp = _m_tiling(M)
    a = jnp.pad(a, ((0, Mp - M), (0, Kp - K)))
    out = pl.pallas_call(
        functools.partial(_matmul_bias_kernel, apply_relu=apply_relu),
        out_shape=jax.ShapeDtypeStruct((Mp, Np), jnp.float32),
        grid=(grid_m,),
        in_specs=[pl.BlockSpec((TM, Kp), lambda i: (i, 0)),
                  pl.BlockSpec((Kp, Np), lambda i: (0, 0)),
                  pl.BlockSpec((1, Np), lambda i: (0, 0))],
        out_specs=pl.BlockSpec((TM, Np), lambda i: (i, 0)),
        compiler_params=_COMPILER_PARAMS,
    )(a, w_mat, b_pad)
    return out[:M, :out_features]


# ------------------------ one-time parameter prep ---------------------------

def prepare_params(params):
    """Hoisted layout work: OIHW -> [Kp, Np] matmul weights, padded biases,
    and an FC weight re-permuted to consume the NHWC-flattened activation."""
    w1, b1, w2, b2, fw, fb = params

    def conv_wb(w_oihw, b):
        OC, IC, KH, KW = w_oihw.shape
        K = KH * KW * IC
        w_mat = jnp.transpose(w_oihw, (2, 3, 1, 0)).reshape(K, OC)   # (kh,kw,c) rows
        Kp, Np = _round_up(K, _LANE), _round_up(OC, _LANE)
        w_mat = jnp.pad(w_mat, ((0, Kp - K), (0, Np - OC))).astype(jnp.float32)
        b_pad = jnp.pad(b, (0, Np - OC)).reshape(1, Np).astype(jnp.float32)
        return w_mat, b_pad, OC

    w1m, b1p, oc1 = conv_wb(w1, b1)
    w2m, b2p, oc2 = conv_wb(w2, b2)

    # FC: fold PyTorch's NCHW flatten into the weight so the kernel consumes
    # the NHWC-flattened pooled activation directly; pad N (10) to 128.
    NO, KF = fw.shape                       # [10, 32*4*4]
    hw = int(round((KF // oc2) ** 0.5))     # spatial side after pool2 (=4)
    fw_hwc = fw.reshape(NO, oc2, hw, hw).transpose(0, 2, 3, 1).reshape(NO, KF)
    fw_mat = fw_hwc.T                       # [512, 10]
    Np = _round_up(NO, _LANE)
    fw_mat = jnp.pad(fw_mat, ((0, 0), (0, Np - NO))).astype(jnp.float32)
    fb_pad = jnp.pad(fb, (0, Np - NO)).reshape(1, Np).astype(jnp.float32)

    return dict(w1=w1m, b1=b1p, oc1=oc1,
                w2=w2m, b2=b2p, oc2=oc2,
                fw=fw_mat, fb=fb_pad, nout=NO)


def cnn_forward(x_nchw, prep):
    x = jnp.transpose(x_nchw, (0, 2, 3, 1))                          # NCHW -> NHWC
    y = conv5x5_relu_pool2(x, prep["w1"], prep["b1"], prep["oc1"])   # [B,12,12,16]
    y = conv5x5_relu_pool2(y, prep["w2"], prep["b2"], prep["oc2"])   # [B, 4, 4,32]
    y = y.reshape(y.shape[0], -1)        # NHWC flatten (NCHW perm folded into fw)
    return matmul_bias(y, prep["fw"], prep["fb"], prep["nout"], apply_relu=False)


# ------------------------------ reference -----------------------------------

def cnn_reference(x_nchw, params):
    w1, b1, w2, b2, fw, fb = params
    dn = ("NCHW", "OIHW", "NCHW")

    def conv(x, w, b):
        y = jax.lax.conv_general_dilated(x, w, (1, 1), "VALID",
                                         dimension_numbers=dn)
        return jnp.maximum(y + b[None, :, None, None], 0.0)

    def pool(x):
        return jax.lax.reduce_window(x, -jnp.inf, jax.lax.max,
                                     (1, 1, 2, 2), (1, 1, 2, 2), "VALID")

    y = pool(conv(x_nchw, w1, b1))
    y = pool(conv(y, w2, b2))
    y = y.reshape(y.shape[0], -1)
    return y @ fw.T + fb


# --------------------------------- main --------------------------------------

if __name__ == "__main__":
    key = jax.random.PRNGKey(0)
    k = jax.random.split(key, 7)

    # deterministic synthetic parameters (same shapes as the PyTorch module)
    w1 = jax.random.normal(k[0], (16, 1, 5, 5), jnp.float32) * 0.1
    b1 = jax.random.normal(k[1], (16,), jnp.float32) * 0.1
    w2 = jax.random.normal(k[2], (32, 16, 5, 5), jnp.float32) * 0.05
    b2 = jax.random.normal(k[3], (32,), jnp.float32) * 0.1
    fw = jax.random.normal(k[4], (10, 32 * 4 * 4), jnp.float32) * 0.05
    fb = jax.random.normal(k[5], (10,), jnp.float32) * 0.1
    params = (w1, b1, w2, b2, fw, fb)

    # MNIST-sized input (fc1 requires 28x28 spatial), small batch
    x = jax.random.normal(k[6], (2, 1, 28, 28), jnp.float32)

    prep = prepare_params(params)                       # hoisted, done once
    fwd = jax.jit(functools.partial(cnn_forward, prep=prep))

    out = jax.block_until_ready(fwd(x))
    ref = jax.block_until_ready(cnn_reference(x, params))

    assert out.shape == (2, 10), out.shape
    assert jnp.allclose(out, ref, rtol=1e-4, atol=1e-4), (out, ref)
    print("KERNEL_OK")
</pallas_src>

<mosaic_0001>
module attributes {stable_mosaic.version = 11 : i64} {
  func.func @_conv_pool_kernel(%arg0: i32, %arg1: memref<288x128xf32, #tpu.memory_space<vmem>>, %arg2: memref<288x128xf32, #tpu.memory_space<vmem>>, %arg3: memref<288x128xf32, #tpu.memory_space<vmem>>, %arg4: memref<288x128xf32, #tpu.memory_space<vmem>>, %arg5: memref<128x128xf32, #tpu.memory_space<vmem>>, %arg6: memref<1x128xf32, #tpu.memory_space<vmem>>, %arg7: memref<288x128xf32, #tpu.memory_space<vmem>>) attributes {dimension_semantics = [#tpu.dimension_semantics<parallel>], iteration_bounds = array<i64: 1>, scalar_prefetch = 0 : i64, scratch_operands = 0 : i64, tpu.core_type = #tpu.core_type<tc>, window_params = [{transform_indices = @transform_0, window_bounds = array<i64: 288, 128>}, {transform_indices = @transform_1, window_bounds = array<i64: 288, 128>}, {transform_indices = @transform_2, window_bounds = array<i64: 288, 128>}, {transform_indices = @transform_3, window_bounds = array<i64: 288, 128>}, {pipeline_mode = #tpu.pipeline_mode<synchronous>, transform_indices = @transform_4, window_bounds = array<i64: 128, 128>}, {pipeline_mode = #tpu.pipeline_mode<synchronous>, transform_indices = @transform_5, window_bounds = array<i64: 1, 128>}, {transform_indices = @transform_6, window_bounds = array<i64: 288, 128>}]} {
    %c0 = arith.constant 0 : index
    %c0_0 = arith.constant 0 : index
    %0 = vector.load %arg5[%c0, %c0_0] : memref<128x128xf32, #tpu.memory_space<vmem>>, vector<128x128xf32>
    %c0_1 = arith.constant 0 : index
    %c0_2 = arith.constant 0 : index
    %1 = vector.load %arg1[%c0_1, %c0_2] : memref<288x128xf32, #tpu.memory_space<vmem>>, vector<288x128xf32>
    %cst = arith.constant dense<0.000000e+00> : vector<288x128xf32>
    %2 = tpu.matmul %1, %0, %cst {dimension_numbers = #tpu.dot_dimension_numbers<[1], [0], [0], [1], [0, 0, 1, 1], [], []>} : vector<288x128xf32>, vector<128x128xf32>, vector<288x128xf32> -> vector<288x128xf32>
    %c0_3 = arith.constant 0 : index
    %c0_4 = arith.constant 0 : index
    %3 = vector.load %arg2[%c0_3, %c0_4] : memref<288x128xf32, #tpu.memory_space<vmem>>, vector<288x128xf32>
    %cst_5 = arith.constant dense<0.000000e+00> : vector<288x128xf32>
    %4 = tpu.matmul %3, %0, %cst_5 {dimension_numbers = #tpu.dot_dimension_numbers<[1], [0], [0], [1], [0, 0, 1, 1], [], []>} : vector<288x128xf32>, vector<128x128xf32>, vector<288x128xf32> -> vector<288x128xf32>
    %c0_6 = arith.constant 0 : index
    %c0_7 = arith.constant 0 : index
    %5 = vector.load %arg3[%c0_6, %c0_7] : memref<288x128xf32, #tpu.memory_space<vmem>>, vector<288x128xf32>
    %cst_8 = arith.constant dense<0.000000e+00> : vector<288x128xf32>
    %6 = tpu.matmul %5, %0, %cst_8 {dimension_numbers = #tpu.dot_dimension_numbers<[1], [0], [0], [1], [0, 0, 1, 1], [], []>} : vector<288x128xf32>, vector<128x128xf32>, vector<288x128xf32> -> vector<288x128xf32>
    %c0_9 = arith.constant 0 : index
    %c0_10 = arith.constant 0 : index
    %7 = vector.load %arg4[%c0_9, %c0_10] : memref<288x128xf32, #tpu.memory_space<vmem>>, vector<288x128xf32>
    %cst_11 = arith.constant dense<0.000000e+00> : vector<288x128xf32>
    %8 = tpu.matmul %7, %0, %cst_11 {dimension_numbers = #tpu.dot_dimension_numbers<[1], [0], [0], [1], [0, 0, 1, 1], [], []>} : vector<288x128xf32>, vector<128x128xf32>, vector<288x128xf32> -> vector<288x128xf32>
    %9 = arith.maximumf %2, %4 : vector<288x128xf32>
    %10 = arith.maximumf %6, %8 : vector<288x128xf32>
    %11 = arith.maximumf %9, %10 : vector<288x128xf32>
    %c0_12 = arith.constant 0 : index
    %c0_13 = arith.constant 0 : index
    %12 = vector.load %arg6[%c0_12, %c0_13] : memref<1x128xf32, #tpu.memory_space<vmem>>, vector<1x128xf32>
    %13 = vector.broadcast %12 : vector<1x128xf32> to vector<288x128xf32>
    %14 = arith.addf %11, %13 : vector<288x128xf32>
    %cst_14 = arith.constant 0.000000e+00 : f32
    %15 = vector.broadcast %cst_14 : f32 to vector<288x128xf32>
    %16 = arith.maximumf %14, %15 : vector<288x128xf32>
    %c0_15 = arith.constant 0 : index
    %c0_16 = arith.constant 0 : index
    %17 = vector.load %arg7[%c0_15, %c0_16] : memref<288x128xf32, #tpu.memory_space<vmem>>, vector<288x128xf32>
    tpu.vector_store %arg7[%c0_15, %c0_16], %16 {strides = array<i32>} : memref<288x128xf32, #tpu.memory_space<vmem>>, vector<288x128xf32>,
    return
  }
  func.func @transform_0(%arg0: i32) -> (i32, i32) {
    %c0_i32 = arith.constant 0 : i32
    %c0_i32_0 = arith.constant 0 : i32
    return %arg0, %c0_i32 : i32, i32
  }
  func.func @transform_1(%arg0: i32) -> (i32, i32) {
    %c0_i32 = arith.constant 0 : i32
    %c0_i32_0 = arith.constant 0 : i32
    return %arg0, %c0_i32 : i32, i32
  }
  func.func @transform_2(%arg0: i32) -> (i32, i32) {
    %c0_i32 = arith.constant 0 : i32
    %c0_i32_0 = arith.constant 0 : i32
    return %arg0, %c0_i32 : i32, i32
  }
  func.func @transform_3(%arg0: i32) -> (i32, i32) {
    %c0_i32 = arith.constant 0 : i32
    %c0_i32_0 = arith.constant 0 : i32
    return %arg0, %c0_i32 : i32, i32
  }
  func.func @transform_4(%arg0: i32) -> (i32, i32) {
    %c0_i32 = arith.constant 0 : i32
    %c0_i32_0 = arith.constant 0 : i32
    %c0_i32_1 = arith.constant 0 : i32
    return %c0_i32, %c0_i32_0 : i32, i32
  }
  func.func @transform_5(%arg0: i32) -> (i32, i32) {
    %c0_i32 = arith.constant 0 : i32
    %c0_i32_0 = arith.constant 0 : i32
    %c0_i32_1 = arith.constant 0 : i32
    return %c0_i32, %c0_i32_0 : i32, i32
  }
  func.func @transform_6(%arg0: i32) -> (i32, i32) {
    %c0_i32 = arith.constant 0 : i32
    %c0_i32_0 = arith.constant 0 : i32
    return %arg0, %c0_i32 : i32, i32
  }
}

module attributes {stable_mosaic.version = 11 : i64} {
  func.func @_matmul_bias_kernel(%arg0: i32, %arg1: memref<8x512xf32, #tpu.memory_space<vmem>>, %arg2: memref<512x128xf32, #tpu.memory_space<vmem>>, %arg3: memref<1x128xf32, #tpu.memory_space<vmem>>, %arg4: memref<8x128xf32, #tpu.memory_space<vmem>>) attributes {dimension_semantics = [#tpu.dimension_semantics<parallel>], iteration_bounds = array<i64: 1>, scalar_prefetch = 0 : i64, scratch_operands = 0 : i64, tpu.core_type = #tpu.core_type<tc>, window_params = [{transform_indices = @transform_0, window_bounds = array<i64: 8, 512>}, {pipeline_mode = #tpu.pipeline_mode<synchronous>, transform_indices = @transform_1, window_bounds = array<i64: 512, 128>}, {pipeline_mode = #tpu.pipeline_mode<synchronous>, transform_indices = @transform_2, window_bounds = array<i64: 1, 128>}, {transform_indices = @transform_3, window_bounds = array<i64: 8, 128>}]} {
    %c0 = arith.constant 0 : index
    %c0_0 = arith.constant 0 : index
    %0 = vector.load %arg1[%c0, %c0_0] : memref<8x512xf32, #tpu.memory_space<vmem>>, vector<8x512xf32>
    %c0_1 = arith.constant 0 : index
    %c0_2 = arith.constant 0 : index
    %1 = vector.load %arg2[%c0_1, %c0_2] : memref<512x128xf32, #tpu.memory_space<vmem>>, vector<512x128xf32>
    %cst = arith.constant dense<0.000000e+00> : vector<8x128xf32>
    %2 = tpu.matmul %0, %1, %cst {dimension_numbers = #tpu.dot_dimension_numbers<[1], [0], [0], [1], [0, 0, 1, 1], [], []>} : vector<8x512xf32>, vector<512x128xf32>, vector<8x128xf32> -> vector<8x128xf32>
    %c0_3 = arith.constant 0 : index
    %c0_4 = arith.constant 0 : index
    %3 = vector.load %arg3[%c0_3, %c0_4] : memref<1x128xf32, #tpu.memory_space<vmem>>, vector<1x128xf32>
    %4 = vector.broadcast %3 : vector<1x128xf32> to vector<8x128xf32>
    %5 = arith.addf %2, %4 : vector<8x128xf32>
    %c0_5 = arith.constant 0 : index
    %c0_6 = arith.constant 0 : index
    %6 = vector.load %arg4[%c0_5, %c0_6] : memref<8x128xf32, #tpu.memory_space<vmem>>, vector<8x128xf32>
    tpu.vector_store %arg4[%c0_5, %c0_6], %5 {strides = array<i32>} : memref<8x128xf32, #tpu.memory_space<vmem>>, vector<8x128xf32>,
    return
  }
  func.func @transform_0(%arg0: i32) -> (i32, i32) {
    %c0_i32 = arith.constant 0 : i32
    %c0_i32_0 = arith.constant 0 : i32
    return %arg0, %c0_i32 : i32, i32
  }
  func.func @transform_1(%arg0: i32) -> (i32, i32) {
    %c0_i32 = arith.constant 0 : i32
    %c0_i32_0 = arith.constant 0 : i32
    %c0_i32_1 = arith.constant 0 : i32
    return %c0_i32, %c0_i32_0 : i32, i32
  }
  func.func @transform_2(%arg0: i32) -> (i32, i32) {
    %c0_i32 = arith.constant 0 : i32
    %c0_i32_0 = arith.constant 0 : i32
    %c0_i32_1 = arith.constant 0 : i32
    return %c0_i32, %c0_i32_0 : i32, i32
  }
  func.func @transform_3(%arg0: i32) -> (i32, i32) {
    %c0_i32 = arith.constant 0 : i32
    %c0_i32_0 = arith.constant 0 : i32
    return %arg0, %c0_i32 : i32, i32
  }
}

module attributes {stable_mosaic.version = 11 : i64} {
  func.func @_conv_pool_kernel(%arg0: i32, %arg1: memref<32x512xf32, #tpu.memory_space<vmem>>, %arg2: memref<32x512xf32, #tpu.memory_space<vmem>>, %arg3: memref<32x512xf32, #tpu.memory_space<vmem>>, %arg4: memref<32x512xf32, #tpu.memory_space<vmem>>, %arg5: memref<512x128xf32, #tpu.memory_space<vmem>>, %arg6: memref<1x128xf32, #tpu.memory_space<vmem>>, %arg7: memref<32x128xf32, #tpu.memory_space<vmem>>) attributes {dimension_semantics = [#tpu.dimension_semantics<parallel>], iteration_bounds = array<i64: 1>, scalar_prefetch = 0 : i64, scratch_operands = 0 : i64, tpu.core_type = #tpu.core_type<tc>, window_params = [{transform_indices = @transform_0, window_bounds = array<i64: 32, 512>}, {transform_indices = @transform_1, window_bounds = array<i64: 32, 512>}, {transform_indices = @transform_2, window_bounds = array<i64: 32, 512>}, {transform_indices = @transform_3, window_bounds = array<i64: 32, 512>}, {pipeline_mode = #tpu.pipeline_mode<synchronous>, transform_indices = @transform_4, window_bounds = array<i64: 512, 128>}, {pipeline_mode = #tpu.pipeline_mode<synchronous>, transform_indices = @transform_5, window_bounds = array<i64: 1, 128>}, {transform_indices = @transform_6, window_bounds = array<i64: 32, 128>}]} {
    %c0 = arith.constant 0 : index
    %c0_0 = arith.constant 0 : index
    %0 = vector.load %arg5[%c0, %c0_0] : memref<512x128xf32, #tpu.memory_space<vmem>>, vector<512x128xf32>
    %c0_1 = arith.constant 0 : index
    %c0_2 = arith.constant 0 : index
    %1 = vector.load %arg1[%c0_1, %c0_2] : memref<32x512xf32, #tpu.memory_space<vmem>>, vector<32x512xf32>
    %cst = arith.constant dense<0.000000e+00> : vector<32x128xf32>
    %2 = tpu.matmul %1, %0, %cst {dimension_numbers = #tpu.dot_dimension_numbers<[1], [0], [0], [1], [0, 0, 1, 1], [], []>} : vector<32x512xf32>, vector<512x128xf32>, vector<32x128xf32> -> vector<32x128xf32>
    %c0_3 = arith.constant 0 : index
    %c0_4 = arith.constant 0 : index
    %3 = vector.load %arg2[%c0_3, %c0_4] : memref<32x512xf32, #tpu.memory_space<vmem>>, vector<32x512xf32>
    %cst_5 = arith.constant dense<0.000000e+00> : vector<32x128xf32>
    %4 = tpu.matmul %3, %0, %cst_5 {dimension_numbers = #tpu.dot_dimension_numbers<[1], [0], [0], [1], [0, 0, 1, 1], [], []>} : vector<32x512xf32>, vector<512x128xf32>, vector<32x128xf32> -> vector<32x128xf32>
    %c0_6 = arith.constant 0 : index
    %c0_7 = arith.constant 0 : index
    %5 = vector.load %arg3[%c0_6, %c0_7] : memref<32x512xf32, #tpu.memory_space<vmem>>, vector<32x512xf32>
    %cst_8 = arith.constant dense<0.000000e+00> : vector<32x128xf32>
    %6 = tpu.matmul %5, %0, %cst_8 {dimension_numbers = #tpu.dot_dimension_numbers<[1], [0], [0], [1], [0, 0, 1, 1], [], []>} : vector<32x512xf32>, vector<512x128xf32>, vector<32x128xf32> -> vector<32x128xf32>
    %c0_9 = arith.constant 0 : index
    %c0_10 = arith.constant 0 : index
    %7 = vector.load %arg4[%c0_9, %c0_10] : memref<32x512xf32, #tpu.memory_space<vmem>>, vector<32x512xf32>
    %cst_11 = arith.constant dense<0.000000e+00> : vector<32x128xf32>
    %8 = tpu.matmul %7, %0, %cst_11 {dimension_numbers = #tpu.dot_dimension_numbers<[1], [0], [0], [1], [0, 0, 1, 1], [], []>} : vector<32x512xf32>, vector<512x128xf32>, vector<32x128xf32> -> vector<32x128xf32>
    %9 = arith.maximumf %2, %4 : vector<32x128xf32>
    %10 = arith.maximumf %6, %8 : vector<32x128xf32>
    %11 = arith.maximumf %9, %10 : vector<32x128xf32>
    %c0_12 = arith.constant 0 : index
    %c0_13 = arith.constant 0 : index
    %12 = vector.load %arg6[%c0_12, %c0_13] : memref<1x128xf32, #tpu.memory_space<vmem>>, vector<1x128xf32>
    %13 = vector.broadcast %12 : vector<1x128xf32> to vector<32x128xf32>
    %14 = arith.addf %11, %13 : vector<32x128xf32>
    %cst_14 = arith.constant 0.000000e+00 : f32
    %15 = vector.broadcast %cst_14 : f32 to vector<32x128xf32>
    %16 = arith.maximumf %14, %15 : vector<32x128xf32>
    %c0_15 = arith.constant 0 : index
    %c0_16 = arith.constant 0 : index
    %17 = vector.load %arg7[%c0_15, %c0_16] : memref<32x128xf32, #tpu.memory_space<vmem>>, vector<32x128xf32>
    tpu.vector_store %arg7[%c0_15, %c0_16], %16 {strides = array<i32>} : memref<32x128xf32, #tpu.memory_space<vmem>>, vector<32x128xf32>,
    return
  }
  func.func @transform_0(%arg0: i32) -> (i32, i32) {
    %c0_i32 = arith.constant 0 : i32
    %c0_i32_0 = arith.constant 0 : i32
    return %arg0, %c0_i32 : i32, i32
  }
  func.func @transform_1(%arg0: i32) -> (i32, i32) {
    %c0_i32 = arith.constant 0 : i32
    %c0_i32_0 = arith.constant 0 : i32
    return %arg0, %c0_i32 : i32, i32
  }
  func.func @transform_2(%arg0: i32) -> (i32, i32) {
    %c0_i32 = arith.constant 0 : i32
    %c0_i32_0 = arith.constant 0 : i32
    return %arg0, %c0_i32 : i32, i32
  }
  func.func @transform_3(%arg0: i32) -> (i32, i32) {
    %c0_i32 = arith.constant 0 : i32
    %c0_i32_0 = arith.constant 0 : i32
    return %arg0, %c0_i32 : i32, i32
  }
  func.func @transform_4(%arg0: i32) -> (i32, i32) {
    %c0_i32 = arith.constant 0 : i32
    %c0_i32_0 = arith.constant 0 : i32
    %c0_i32_1 = arith.constant 0 : i32
    return %c0_i32, %c0_i32_0 : i32, i32
  }
  func.func @transform_5(%arg0: i32) -> (i32, i32) {
    %c0_i32 = arith.constant 0 : i32
    %c0_i32_0 = arith.constant 0 : i32
    %c0_i32_1 = arith.constant 0 : i32
    return %c0_i32, %c0_i32_0 : i32, i32
  }
  func.func @transform_6(%arg0: i32) -> (i32, i32) {
    %c0_i32 = arith.constant 0 : i32
    %c0_i32_0 = arith.constant 0 : i32
    return %arg0, %c0_i32 : i32, i32
  }
}

</mosaic_0001>

<llo_original>
// kernel: cnn_forward.3
$region0: #{cnn_forward.3}
  #allocation0 [shape = 'u32[]', space=smem, size = 0x4, offset = 0x4, fixed_abs, tag = 'smem constant byte address 0x4 - core index']
  #allocation1 [shape = 'u32[144,128]{1,0:T(1,128)}', space=vmem, size = 0x12000, scoped, tag = 'internal scratch']
  %s0 = inlined_call_operand.vmem [shape: f32[288,128], index: 0, kind: input, shape index: {}]
  %s1 = inlined_call_operand.vmem [shape: f32[288,128], index: 1, kind: input, shape index: {}]
  %s2 = inlined_call_operand.vmem [shape: f32[288,128], index: 2, kind: input, shape index: {}]
  %s3 = inlined_call_operand.vmem [shape: f32[288,128], index: 3, kind: input, shape index: {}]
  %s4 = inlined_call_operand.vmem [shape: f32[128,128], index: 4, kind: input, shape index: {}]
  %s5 = inlined_call_operand.vmem [shape: f32[1,128], index: 5, kind: input, shape index: {}]
  %s6 = inlined_call_operand.vmem [shape: f32[288,128], index: 6, kind: output, shape index: {}]
  %s7 = sld [smem:[#allocation0]]
  $region34: #{cnn_forward.3} parent=0
    _
  %s9 = ssub.s32 1, %s7
  %s10 = scalar_select 0, %s9, %s7
  // Predicated region
  $region2: #{cnn_forward.3} parent=0 // pred_check
    _
  $region3: #{cnn_forward.3} parent=0 // pred_check_branch
    %12 = sbr.rel (0) target = $region5
  $region4: #{cnn_forward.3} parent=0 // pred_region
    _
  $region5: #{cnn_forward.3} parent=0 // pred_fallthru
    _
  // Predicated region
  $region6: #{cnn_forward.3} parent=0 // pred_check
    _
  $region7: #{cnn_forward.3} parent=0 // pred_check_branch
    %14 = sbr.rel (0) target = $region9
  $region8: #{cnn_forward.3} parent=0 // pred_region
    _
  $region9: #{cnn_forward.3} parent=0 // pred_fallthru
    _
  // Predicated region
  $region10: #{cnn_forward.3} parent=0 // pred_check
    _
  $region11: #{cnn_forward.3} parent=0 // pred_check_branch
    %16 = sbr.rel (0) target = $region13
  $region12: #{cnn_forward.3} parent=0 // pred_region
    _
  $region13: #{cnn_forward.3} parent=0 // pred_fallthru
    _
  // Predicated region
  $region14: #{cnn_forward.3} parent=0 // pred_check
    _
  $region15: #{cnn_forward.3} parent=0 // pred_check_branch
    %18 = sbr.rel (0) target = $region17
  $region16: #{cnn_forward.3} parent=0 // pred_region
    _
  $region17: #{cnn_forward.3} parent=0 // pred_fallthru
    _
  // Predicated region
  $region18: #{cnn_forward.3} parent=0 // pred_check
    _
  $region19: #{cnn_forward.3} parent=0 // pred_check_branch
    %20 = sbr.rel (0) target = $region21
  $region20: #{cnn_forward.3} parent=0 // pred_region
    _
  $region21: #{cnn_forward.3} parent=0 // pred_fallthru
    _
  // Predicated region
  $region22: #{cnn_forward.3} parent=0 // pred_check
    _
  $region23: #{cnn_forward.3} parent=0 // pred_check_branch
    %22 = sbr.rel (0) target = $region25
  $region24: #{cnn_forward.3} parent=0 // pred_region
    _
  $region25: #{cnn_forward.3} parent=0 // pred_fallthru
    _
  %v23 = vld [vmem:[%s4] sm:$0xff]
  %v24 = vld [vmem:[%s4 + $0x8] sm:$0xff]
  %v25 = vld [vmem:[%s4 + $0x10] sm:$0xff]
  %v26 = vld [vmem:[%s4 + $0x18] sm:$0xff]
  %v27 = vld [vmem:[%s4 + $0x20] sm:$0xff]
  %v28 = vld [vmem:[%s4 + $0x28] sm:$0xff]
  %v29 = vld [vmem:[%s4 + $0x30] sm:$0xff]
  %v30 = vld [vmem:[%s4 + $0x38] sm:$0xff]
  %v31 = vld [vmem:[%s4 + $0x40] sm:$0xff]
  %v32 = vld [vmem:[%s4 + $0x48] sm:$0xff]
  %v33 = vld [vmem:[%s4 + $0x50] sm:$0xff]
  %v34 = vld [vmem:[%s4 + $0x58] sm:$0xff]
  %v35 = vld [vmem:[%s4 + $0x60] sm:$0xff]
  %v36 = vld [vmem:[%s4 + $0x68] sm:$0xff]
  %v37 = vld [vmem:[%s4 + $0x70] sm:$0xff]
  %v38 = vld [vmem:[%s4 + $0x78] sm:$0xff]
  %v39 = vld [vmem:[%s0] sm:$0xff]
  %v40 = vld [vmem:[%s0 + $0x8] sm:$0xff]
  %v41 = vld [vmem:[%s0 + $0x10] sm:$0xff]
  %v42 = vld [vmem:[%s0 + $0x18] sm:$0xff]
  %v43 = vld [vmem:[%s0 + $0x20] sm:$0xff]
  %v44 = vld [vmem:[%s0 + $0x28] sm:$0xff]
  %v45 = vld [vmem:[%s0 + $0x30] sm:$0xff]
  %v46 = vld [vmem:[%s0 + $0x38] sm:$0xff]
  %v47 = vld [vmem:[%s0 + $0x40] sm:$0xff]
  %v48 = vld [vmem:[%s0 + $0x48] sm:$0xff]
  %v49 = vld [vmem:[%s0 + $0x50] sm:$0xff]
  %v50 = vld [vmem:[%s0 + $0x58] sm:$0xff]
  %v51 = vld [vmem:[%s0 + $0x60] sm:$0xff]
  %v52 = vld [vmem:[%s0 + $0x68] sm:$0xff]
  %v53 = vld [vmem:[%s0 + $0x70] sm:$0xff]
  %v54 = vld [vmem:[%s0 + $0x78] sm:$0xff]
  %v55 = vld [vmem:[%s0 + $0x80] sm:$0xff]
  %v56 = vld [vmem:[%s0 + $0x88] sm:$0xff]
  %v57 = vld [vmem:[%s0 + $0x90] sm:$0xff]
  %v58 = vld [vmem:[%s0 + $0x98] sm:$0xff]
  %v59 = vld [vmem:[%s0 + $0xa0] sm:$0xff]
  %v60 = vld [vmem:[%s0 + $0xa8] sm:$0xff]
  %v61 = vld [vmem:[%s0 + $0xb0] sm:$0xff]
  %v62 = vld [vmem:[%s0 + $0xb8] sm:$0xff]
  %v63 = vld [vmem:[%s0 + $0xc0] sm:$0xff]
  %v64 = vld [vmem:[%s0 + $0xc8] sm:$0xff]
  %v65 = vld [vmem:[%s0 + $0xd0] sm:$0xff]
  %v66 = vld [vmem:[%s0 + $0xd8] sm:$0xff]
  %v67 = vld [vmem:[%s0 + $0xe0] sm:$0xff]
  %v68 = vld [vmem:[%s0 + $0xe8] sm:$0xff]
  %v69 = vld [vmem:[%s0 + $0xf0] sm:$0xff]
  %v70 = vld [vmem:[%s0 + $0xf8] sm:$0xff]
  %v71 = vld [vmem:[%s0 + $0x100] sm:$0xff]
  %v72 = vld [vmem:[%s0 + $0x108] sm:$0xff]
  %v73 = vld [vmem:[%s0 + $0x110] sm:$0xff]
  %v74 = vld [vmem:[%s0 + $0x118] sm:$0xff]
  %75 = vmatprep.subr.mxu0 0.0
  %76 = vmatpush1.msra.mxu0 %v23
  %77 = vmatprep.subr.mxu0 0.0
  %78 = vmatpush1.msra.mxu0 %v24
  %79 = vmatprep.subr.mxu0 0.0
  %80 = vmatpush1.msra.mxu0 %v25
  %81 = vmatprep.subr.mxu0 0.0
  %82 = vmatpush1.msra.mxu0 %v26
  %83 = vmatprep.subr.mxu0 0.0
  %84 = vmatpush1.msra.mxu0 %v27
  %85 = vmatprep.subr.mxu0 0.0
  %86 = vmatpush1.msra.mxu0 %v28
  %87 = vmatprep.subr.mxu0 0.0
  %88 = vmatpush1.msra.mxu0 %v29
  %89 = vmatprep.subr.mxu0 0.0
  %90 = vmatpush1.msra.mxu0 %v30
  %91 = vmatprep.subr.mxu0 0.0
  %92 = vmatpush1.msra.mxu0 %v31
  %93 = vmatprep.subr.mxu0 0.0
  %94 = vmatpush1.msra.mxu0 %v32
  %95 = vmatprep.subr.mxu0 0.0
  %96 = vmatpush1.msra.mxu0 %v33
  %97 = vmatprep.subr.mxu0 0.0
  %98 = vmatpush1.msra.mxu0 %v34
  %99 = vmatprep.subr.mxu0 0.0
  %100 = vmatpush1.msra.mxu0 %v35
  %101 = vmatprep.subr.mxu0 0.0
  %102 = vmatpush1.msra.mxu0 %v36
  %103 = vmatprep.subr.mxu0 0.0
  %104 = vmatpush1.msra.mxu0 %v37
  %105 = vmatprep.subr.mxu0 0.0
  %106 = vmatpush1.msra.mxu0 %v38
  %107 = vmatprep.subr.mxu0 0.0
  %108 = vmatpush1.msra.mxu0 0.0
  %109 = vmatprep.subr.mxu0 0.0
  %110 = vmatpush1.msra.mxu0 0.0
  %111 = vmatprep.subr.mxu0 0.0
  %112 = vmatpush1.msra.mxu0 0.0
  %113 = vmatprep.subr.mxu0 0.0
  %114 = vmatpush1.msra.mxu0 0.0
  %115 = vmatprep.subr.mxu0 0.0
  %116 = vmatpush1.msra.mxu0 0.0
  %117 = vmatprep.subr.mxu0 0.0
  %118 = vmatpush1.msra.mxu0 0.0
  %119 = vmatprep.subr.mxu0 0.0
  %120 = vmatpush1.msra.mxu0 0.0
  %121 = vmatprep.subr.mxu0 0.0
  %122 = vmatpush1.msra.mxu0 0.0
  %123 = vmatprep.subr.mxu0 0.0
  %124 = vmatpush1.msra.mxu0 0.0
  %125 = vmatprep.subr.mxu0 0.0
  %126 = vmatpush1.msra.mxu0 0.0
  %127 = vmatprep.subr.mxu0 0.0
  %128 = vmatpush1.msra.mxu0 0.0
  %129 = vmatprep.subr.mxu0 0.0
  %130 = vmatpush1.msra.mxu0 0.0
  %131 = vmatprep.subr.mxu0 0.0
  %132 = vmatpush1.msra.mxu0 0.0
  %133 = vmatprep.subr.mxu0 0.0
  %134 = vmatpush1.msra.mxu0 0.0
  %135 = vmatprep.subr.mxu0 0.0
  %136 = vmatpush1.msra.mxu0 0.0
  %137 = vmatprep.subr.mxu0 0.0
  %138 = vmatpush1.msra.mxu0 0.0
  %139 = vmatprep.mubr.f32.mxu0 0.0
  %140 = vmatmul.mubr.f32.gmra.mrb[0].mxu0 %v39
  %v141 = vpop.f32.mrb[0].mxu0
  %v142 = vadd.f32 0.0, %v141
  %v143 = vpop.f32.mrb[0].mxu0
  %144 = vmatprep.mubr.f32.mxu0 0.0
  %145 = vmatmul.mubr.f32.gmra.mrb[0].mxu0 %v40
  %v146 = vpop.f32.mrb[0].mxu0
  %v147 = vadd.f32 0.0, %v146
  %v148 = vpop.f32.mrb[0].mxu0
  %149 = vmatprep.mubr.f32.mxu0 0.0
  %150 = vmatmul.mubr.f32.gmra.mrb[0].mxu0 %v41
  %v151 = vpop.f32.mrb[0].mxu0
  %v152 = vadd.f32 0.0, %v151
  %v153 = vpop.f32.mrb[0].mxu0
  %154 = vmatprep.mubr.f32.mxu0 0.0
  %155 = vmatmul.mubr.f32.gmra.mrb[0].mxu0 %v42
  %v156 = vpop.f32.mrb[0].mxu0
  %v157 = vadd.f32 0.0, %v156
  %v158 = vpop.f32.mrb[0].mxu0
  %159 = vmatprep.mubr.f32.mxu0 0.0
  %160 = vmatmul.mubr.f32.gmra.mrb[0].mxu0 %v43
  %v161 = vpop.f32.mrb[0].mxu0
  %v162 = vadd.f32 0.0, %v161
  %v163 = vpop.f32.mrb[0].mxu0
  %164 = vmatprep.mubr.f32.mxu0 0.0
  %165 = vmatmul.mubr.f32.gmra.mrb[0].mxu0 %v44
  %v166 = vpop.f32.mrb[0].mxu0
  %v167 = vadd.f32 0.0, %v166
  %v168 = vpop.f32.mrb[0].mxu0
  %169 = vmatprep.mubr.f32.mxu0 0.0
  %170 = vmatmul.mubr.f32.gmra.mrb[0].mxu0 %v45
  %v171 = vpop.f32.mrb[0].mxu0
  %v172 = vadd.f32 0.0, %v171
  %v173 = vpop.f32.mrb[0].mxu0
  %174 = vmatprep.mubr.f32.mxu0 0.0
  %175 = vmatmul.mubr.f32.gmra.mrb[0].mxu0 %v46
  %v176 = vpop.f32.mrb[0].mxu0
  %v177 = vadd.f32 0.0, %v176
  %v178 = vpop.f32.mrb[0].mxu0
  %179 = vmatprep.mubr.f32.mxu0 0.0
  %180 = vmatmul.mubr.f32.gmra.mrb[0].mxu0 %v47
  %v181 = vpop.f32.mrb[0].mxu0
  %v182 = vadd.f32 0.0, %v181
  %v183 = vpop.f32.mrb[0].mxu0
  %184 = vmatprep.mubr.f32.mxu0 0.0
  %185 = vmatmul.mubr.f32.gmra.mrb[0].mxu0 %v48
  %v186 = vpop.f32.mrb[0].mxu0
  %v187 = vadd.f32 0.0, %v186
  %v188 = vpop.f32.mrb[0].mxu0
  %189 = vmatprep.mubr.f32.mxu0 0.0
  %190 = vmatmul.mubr.f32.gmra.mrb[0].mxu0 %v49
  %v191 = vpop.f32.mrb[0].mxu0
  %v192 = vadd.f32 0.0, %v191
  %v193 = vpop.f32.mrb[0].mxu0
  %194 = vmatprep.mubr.f32.mxu0 0.0
  %195 = vmatmul.mubr.f32.gmra.mrb[0].mxu0 %v50
  %v196 = vpop.f32.mrb[0].mxu0
  %v197 = vadd.f32 0.0, %v196
  %v198 = vpop.f32.mrb[0].mxu0
  %199 = vmatprep.mubr.f32.mxu0 0.0
  %200 = vmatmul.mubr.f32.gmra.mrb[0].mxu0 %v51
  %v201 = vpop.f32.mrb[0].mxu0
  %v202 = vadd.f32 0.0, %v201
  %v203 = vpop.f32.mrb[0].mxu0
  %204 = vmatprep.mubr.f32.mxu0 0.0
  %205 = vmatmul.mubr.f32.gmra.mrb[0].mxu0 %v52
  %v206 = vpop.f32.mrb[0].mxu0
  %v207 = vadd.f32 0.0, %v206
  %v208 = vpop.f32.mrb[0].mxu0
  %209 = vmatprep.mubr.f32.mxu0 0.0
  %210 = vmatmul.mubr.f32.gmra.mrb[0].mxu0 %v53
  %v211 = vpop.f32.mrb[0].mxu0
  %v212 = vadd.f32 0.0, %v211
  %v213 = vpop.f32.mrb[0].mxu0
  %214 = vmatprep.mubr.f32.mxu0 0.0
  %215 = vmatmul.mubr.f32.gmra.mrb[0].mxu0 %v54
  %v216 = vpop.f32.mrb[0].mxu0
  %v217 = vadd.f32 0.0, %v216
  %v218 = vpop.f32.mrb[0].mxu0
  %219 = vmatprep.mubr.f32.mxu0 0.0
  %220 = vmatmul.mubr.f32.gmra.mrb[0].mxu0 %v55
  %v221 = vpop.f32.mrb[0].mxu0
  %v222 = vadd.f32 0.0, %v221
  %v223 = vpop.f32.mrb[0].mxu0
  %224 = vmatprep.mubr.f32.mxu0 0.0
  %225 = vmatmul.mubr.f32.gmra.mrb[0].mxu0 %v56
  %v226 = vpop.f32.mrb[0].mxu0
  %v227 = vadd.f32 0.0, %v226
  %v228 = vpop.f32.mrb[0].mxu0
  %229 = vmatprep.mubr.f32.mxu0 0.0
  %230 = vmatmul.mubr.f32.gmra.mrb[0].mxu0 %v57
  %v231 = vpop.f32.mrb[0].mxu0
  %v232 = vadd.f32 0.0, %v231
  %v233 = vpop.f32.mrb[0].mxu0
  %234 = vmatprep.mubr.f32.mxu0 0.0
  %235 = vmatmul.mubr.f32.gmra.mrb[0].mxu0 %v58
  %v236 = vpop.f32.mrb[0].mxu0
  %v237 = vadd.f32 0.0, %v236
  %v238 = vpop.f32.mrb[0].mxu0
  %239 = vmatprep.mubr.f32.mxu0 0.0
  %240 = vmatmul.mubr.f32.gmra.mrb[0].mxu0 %v59
  %v241 = vpop.f32.mrb[0].mxu0
  %v242 = vadd.f32 0.0, %v241
  %v243 = vpop.f32.mrb[0].mxu0
  %244 = vmatprep.mubr.f32.mxu0 0.0
  %245 = vmatmul.mubr.f32.gmra.mrb[0].mxu0 %v60
  %v246 = vpop.f32.mrb[0].mxu0
  %v247 = vadd.f32 0.0, %v246
  %v248 = vpop.f32.mrb[0].mxu0
  %249 = vmatprep.mubr.f32.mxu0 0.0
  %250 = vmatmul.mubr.f32.gmra.mrb[0].mxu0 %v61
  %v251 = vpop.f32.mrb[0].mxu0
  %v252 = vadd.f32 0.0, %v251
  %v253 = vpop.f32.mrb[0].mxu0
  %254 = vmatprep.mubr.f32.mxu0 0.0
  %255 = vmatmul.mubr.f32.gmra.mrb[0].mxu0 %v62
  %v256 = vpop.f32.mrb[0].mxu0
  %v257 = vadd.f32 0.0, %v256
  %v258 = vpop.f32.mrb[0].mxu0
  %259 = vmatprep.mubr.f32.mxu0 0.0
  %260 = vmatmul.mubr.f32.gmra.mrb[0].mxu0 %v63
  %v261 = vpop.f32.mrb[0].mxu0
  %v262 = vadd.f32 0.0, %v261
  %v263 = vpop.f32.mrb[0].mxu0
  %264 = vmatprep.mubr.f32.mxu0 0.0
  %265 = vmatmul.mubr.f32.gmra.mrb[0].mxu0 %v64
  %v266 = vpop.f32.mrb[0].mxu0
  %v267 = vadd.f32 0.0, %v266
  %v268 = vpop.f32.mrb[0].mxu0
  %269 = vmatprep.mubr.f32.mxu0 0.0
  %270 = vmatmul.mubr.f32.gmra.mrb[0].mxu0 %v65
  %v271 = vpop.f32.mrb[0].mxu0
  %v272 = vadd.f32 0.0, %v271
  %v273 = vpop.f32.mrb[0].mxu0
  %274 = vmatprep.mubr.f32.mxu0 0.0
  %275 = vmatmul.mubr.f32.gmra.mrb[0].mxu0 %v66
  %v276 = vpop.f32.mrb[0].mxu0
  %v277 = vadd.f32 0.0, %v276
  %v278 = vpop.f32.mrb[0].mxu0
  %279 = vmatprep.mubr.f32.mxu0 0.0
  %280 = vmatmul.mubr.f32.gmra.mrb[0].mxu0 %v67
  %v281 = vpop.f32.mrb[0].mxu0
  %v282 = vadd.f32 0.0, %v281
  %v283 = vpop.f32.mrb[0].mxu0
  %284 = vmatprep.mubr.f32.mxu0 0.0
  %285 = vmatmul.mubr.f32.gmra.mrb[0].mxu0 %v68
  %v286 = vpop.f32.mrb[0].mxu0
  %v287 = vadd.f32 0.0, %v286
  %v288 = vpop.f32.mrb[0].mxu0
  %289 = vmatprep.mubr.f32.mxu0 0.0
  %290 = vmatmul.mubr.f32.gmra.mrb[0].mxu0 %v69
  %v291 = vpop.f32.mrb[0].mxu0
  %v292 = vadd.f32 0.0, %v291
  %v293 = vpop.f32.mrb[0].mxu0
  %294 = vmatprep.mubr.f32.mxu0 0.0
  %295 = vmatmul.mubr.f32.gmra.mrb[0].mxu0 %v70
  %v296 = vpop.f32.mrb[0].mxu0
  %v297 = vadd.f32 0.0, %v296
  %v298 = vpop.f32.mrb[0].mxu0
  %299 = vmatprep.mubr.f32.mxu0 0.0
  %300 = vmatmul.mubr.f32.gmra.mrb[0].mxu0 %v71
  %v301 = vpop.f32.mrb[0].mxu0
  %v302 = vadd.f32 0.0, %v301
  %v303 = vpop.f32.mrb[0].mxu0
  %304 = vmatprep.mubr.f32.mxu0 0.0
  %305 = vmatmul.mubr.f32.gmra.mrb[0].mxu0 %v72
  %v306 = vpop.f32.mrb[0].mxu0
  %v307 = vadd.f32 0.0, %v306
  %v308 = vpop.f32.mrb[0].mxu0
  %309 = vmatprep.mubr.f32.mxu0 0.0
  %310 = vmatmul.mubr.f32.gmra.mrb[0].mxu0 %v73
  %v311 = vpop.f32.mrb[0].mxu0
  %v312 = vadd.f32 0.0, %v311
  %v313 = vpop.f32.mrb[0].mxu0
  %314 = vmatprep.mubr.f32.mxu0 0.0
  %315 = vmatmul.mubr.f32.gmra.mrb[0].mxu0 %v74
  %v316 = vpop.f32.mrb[0].mxu0
  %v317 = vadd.f32 0.0, %v316
  %v318 = vpop.f32.mrb[0].mxu0
  %319 = vdwg.mxu0
  %v320 = vld [vmem:[%s1] sm:$0xff]
  %v321 = vld [vmem:[%s1 + $0x8] sm:$0xff]
  %v322 = vld [vmem:[%s1 + $0x10] sm:$0xff]
  %v323 = vld [vmem:[%s1 + $0x18] sm:$0xff]
  %v324 = vld [vmem:[%s1 + $0x20] sm:$0xff]
  %v325 = vld [vmem:[%s1 + $0x28] sm:$0xff]
  %v326 = vld [vmem:[%s1 + $0x30] sm:$0xff]
  %v327 = vld [vmem:[%s1 + $0x38] sm:$0xff]
  %v328 = vld [vmem:[%s1 + $0x40] sm:$0xff]
  %v329 = vld [vmem:[%s1 + $0x48] sm:$0xff]
  %v330 = vld [vmem:[%s1 + $0x50] sm:$0xff]
  %v331 = vld [vmem:[%s1 + $0x58] sm:$0xff]
  %v332 = vld [vmem:[%s1 + $0x60] sm:$0xff]
  %v333 = vld [vmem:[%s1 + $0x68] sm:$0xff]
  %v334 = vld [vmem:[%s1 + $0x70] sm:$0xff]
  %v335 = vld [vmem:[%s1 + $0x78] sm:$0xff]
  %v336 = vld [vmem:[%s1 + $0x80] sm:$0xff]
  %v337 = vld [vmem:[%s1 + $0x88] sm:$0xff]
  %v338 = vld [vmem:[%s1 + $0x90] sm:$0xff]
  %v339 = vld [vmem:[%s1 + $0x98] sm:$0xff]
  %v340 = vld [vmem:[%s1 + $0xa0] sm:$0xff]
  %v341 = vld [vmem:[%s1 + $0xa8] sm:$0xff]
  %v342 = vld [vmem:[%s1 + $0xb0] sm:$0xff]
  %v343 = vld [vmem:[%s1 + $0xb8] sm:$0xff]
  %v344 = vld [vmem:[%s1 + $0xc0] sm:$0xff]
  %v345 = vld [vmem:[%s1 + $0xc8] sm:$0xff]
  %v346 = vld [vmem:[%s1 + $0xd0] sm:$0xff]
  %v347 = vld [vmem:[%s1 + $0xd8] sm:$0xff]
  %v348 = vld [vmem:[%s1 + $0xe0] sm:$0xff]
  %v349 = vld [vmem:[%s1 + $0xe8] sm:$0xff]
  %v350 = vld [vmem:[%s1 + $0xf0] sm:$0xff]
  %v351 = vld [vmem:[%s1 + $0xf8] sm:$0xff]
  %v352 = vld [vmem:[%s1 + $0x100] sm:$0xff]
  %v353 = vld [vmem:[%s1 + $0x108] sm:$0xff]
  %v354 = vld [vmem:[%s1 + $0x110] sm:$0xff]
  %v355 = vld [vmem:[%s1 + $0x118] sm:$0xff]
  %356 = vmatprep.subr.mxu0 0.0
  %357 = vmatpush1.msra.mxu0 %v23
  %358 = vmatprep.subr.mxu0 0.0
  %359 = vmatpush1.msra.mxu0 %v24
  %360 = vmatprep.subr.mxu0 0.0
  %361 = vmatpush1.msra.mxu0 %v25
  %362 = vmatprep.subr.mxu0 0.0
  %363 = vmatpush1.msra.mxu0 %v26
  %364 = vmatprep.subr.mxu0 0.0
  %365 = vmatpush1.msra.mxu0 %v27
  %366 = vmatprep.subr.mxu0 0.0
  %367 = vmatpush1.msra.mxu0 %v28
  %368 = vmatprep.subr.mxu0 0.0
  %369 = vmatpush1.msra.mxu0 %v29
  %370 = vmatprep.subr.mxu0 0.0
  %371 = vmatpush1.msra.mxu0 %v30
  %372 = vmatprep.subr.mxu0 0.0
  %373 = vmatpush1.msra.mxu0 %v31
  %374 = vmatprep.subr.mxu0 0.0
  %375 = vmatpush1.msra.mxu0 %v32
  %376 = vmatprep.subr.mxu0 0.0
  %377 = vmatpush1.msra.mxu0 %v33
  %378 = vmatprep.subr.mxu0 0.0
  %379 = vmatpush1.msra.mxu0 %v34
  %380 = vmatprep.subr.mxu0 0.0
  %381 = vmatpush1.msra.mxu0 %v35
  %382 = vmatprep.subr.mxu0 0.0
  %383 = vmatpush1.msra.mxu0 %v36
  %384 = vmatprep.subr.mxu0 0.0
  %385 = vmatpush1.msra.mxu0 %v37
  %386 = vmatprep.subr.mxu0 0.0
  %387 = vmatpush1.msra.mxu0 %v38
  %388 = vmatprep.subr.mxu0 0.0
  %389 = vmatpush1.msra.mxu0 0.0
  %390 = vmatprep.subr.mxu0 0.0
  %391 = vmatpush1.msra.mxu0 0.0
  %392 = vmatprep.subr.mxu0 0.0
  %393 = vmatpush1.msra.mxu0 0.0
  %394 = vmatprep.subr.mxu0 0.0
  %395 = vmatpush1.msra.mxu0 0.0
  %396 = vmatprep.subr.mxu0 0.0
  %397 = vmatpush1.msra.mxu0 0.0
  %398 = vmatprep.subr.mxu0 0.0
  %399 = vmatpush1.msra.mxu0 0.0
  %400 = vmatprep.subr.mxu0 0.0
  %401 = vmatpush1.msra.mxu0 0.0
  %402 = vmatprep.subr.mxu0 0.0
  %403 = vmatpush1.msra.mxu0 0.0
  %404 = vmatprep.subr.mxu0 0.0
  %405 = vmatpush1.msra.mxu0 0.0
  %406 = vmatprep.subr.mxu0 0.0
  %407 = vmatpush1.msra.mxu0 0.0
  %408 = vmatprep.subr.mxu0 0.0
  %409 = vmatpush1.msra.mxu0 0.0
  %410 = vmatprep.subr.mxu0 0.0
  %411 = vmatpush1.msra.mxu0 0.0
  %412 = vmatprep.subr.mxu0 0.0
  %413 = vmatpush1.msra.mxu0 0.0
  %414 = vmatprep.subr.mxu0 0.0
  %415 = vmatpush1.msra.mxu0 0.0
  %416 = vmatprep.subr.mxu0 0.0
  %417 = vmatpush1.msra.mxu0 0.0
  %418 = vmatprep.subr.mxu0 0.0
  %419 = vmatpush1.msra.mxu0 0.0
  %420 = vmatprep.mubr.f32.mxu0 0.0
  %421 = vmatmul.mubr.f32.gmra.mrb[0].mxu0 %v320
  %v422 = vpop.f32.mrb[0].mxu0
  %v423 = vadd.f32 0.0, %v422
  %v424 = vpop.f32.mrb[0].mxu0
  %425 = vmatprep.mubr.f32.mxu0 0.0
  %426 = vmatmul.mubr.f32.gmra.mrb[0].mxu0 %v321
  %v427 = vpop.f32.mrb[0].mxu0
  %v428 = vadd.f32 0.0, %v427
  %v429 = vpop.f32.mrb[0].mxu0
  %430 = vmatprep.mubr.f32.mxu0 0.0
  %431 = vmatmul.mubr.f32.gmra.mrb[0].mxu0 %v322
  %v432 = vpop.f32.mrb[0].mxu0
  %v433 = vadd.f32 0.0, %v432
  %v434 = vpop.f32.mrb[0].mxu0
  %435 = vmatprep.mubr.f32.mxu0 0.0
  %436 = vmatmul.mubr.f32.gmra.mrb[0].mxu0 %v323
  %v437 = vpop.f32.mrb[0].mxu0
  %v438 = vadd.f32 0.0, %v437
  %v439 = vpop.f32.mrb[0].mxu0
  %440 = vmatprep.mubr.f32.mxu0 0.0
  %441 = vmatmul.mubr.f32.gmra.mrb[0].mxu0 %v324
  %v442 = vpop.f32.mrb[0].mxu0
  %v443 = vadd.f32 0.0, %v442
  %v444 = vpop.f32.mrb[0].mxu0
  %445 = vmatprep.mubr.f32.mxu0 0.0
  %446 = vmatmul.mubr.f32.gmra.mrb[0].mxu0 %v325
  %v447 = vpop.f32.mrb[0].mxu0
  %v448 = vadd.f32 0.0, %v447
  %v449 = vpop.f32.mrb[0].mxu0
  %450 = vmatprep.mubr.f32.mxu0 0.0
  %451 = vmatmul.mubr.f32.gmra.mrb[0].mxu0 %v326
  %v452 = vpop.f32.mrb[0].mxu0
  %v453 = vadd.f32 0.0, %v452
  %v454 = vpop.f32.mrb[0].mxu0
  %455 = vmatprep.mubr.f32.mxu0 0.0
  %456 = vmatmul.mubr.f32.gmra.mrb[0].mxu0 %v327
  %v457 = vpop.f32.mrb[0].mxu0
  %v458 = vadd.f32 0.0, %v457
  %v459 = vpop.f32.mrb[0].mxu0
  %460 = vmatprep.mubr.f32.mxu0 0.0
  %461 = vmatmul.mubr.f32.gmra.mrb[0].mxu0 %v328
  %v462 = vpop.f32.mrb[0].mxu0
  %v463 = vadd.f32 0.0, %v462
  %v464 = vpop.f32.mrb[0].mxu0
  %465 = vmatprep.mubr.f32.mxu0 0.0
  %466 = vmatmul.mubr.f32.gmra.mrb[0].mxu0 %v329
  %v467 = vpop.f32.mrb[0].mxu0
  %v468 = vadd.f32 0.0, %v467
  %v469 = vpop.f32.mrb[0].mxu0
  %470 = vmatprep.mubr.f32.mxu0 0.0
  %471 = vmatmul.mubr.f32.gmra.mrb[0].mxu0 %v330
  %v472 = vpop.f32.mrb[0].mxu0
  %v473 = vadd.f32 0.0, %v472
  %v474 = vpop.f32.mrb[0].mxu0
  %475 = vmatprep.mubr.f32.mxu0 0.0
  %476 = vmatmul.mubr.f32.gmra.mrb[0].mxu0 %v331
  %v477 = vpop.f32.mrb[0].mxu0
  %v478 = vadd.f32 0.0, %v477
  %v479 = vpop.f32.mrb[0].mxu0
  %480 = vmatprep.mubr.f32.mxu0 0.0
  %481 = vmatmul.mubr.f32.gmra.mrb[0].mxu0 %v332
  %v482 = vpop.f32.mrb[0].mxu0
  %v483 = vadd.f32 0.0, %v482
  %v484 = vpop.f32.mrb[0].mxu0
  %485 = vmatprep.mubr.f32.mxu0 0.0
  %486 = vmatmul.mubr.f32.gmra.mrb[0].mxu0 %v333
  %v487 = vpop.f32.mrb[0].mxu0
  %v488 = vadd.f32 0.0, %v487
  %v489 = vpop.f32.mrb[0].mxu0
  %490 = vmatprep.mubr.f32.mxu0 0.0
  %491 = vmatmul.mubr.f32.gmra.mrb[0].mxu0 %v334
  %v492 = vpop.f32.mrb[0].mxu0
  %v493 = vadd.f32 0.0, %v492
  %v494 = vpop.f32.mrb[0].mxu0
  %495 = vmatprep.mubr.f32.mxu0 0.0
  %496 = vmatmul.mubr.f32.gmra.mrb[0].mxu0 %v335
  %v497 = vpop.f32.mrb[0].mxu0
  %v498 = vadd.f32 0.0, %v497
  %v499 = vpop.f32.mrb[0].mxu0
  %500 = vmatprep.mubr.f32.mxu0 0.0
  %501 = vmatmul.mubr.f32.gmra.mrb[0].mxu0 %v336
  %v502 = vpop.f32.mrb[0].mxu0
  %v503 = vadd.f32 0.0, %v502
  %v504 = vpop.f32.mrb[0].mxu0
  %505 = vmatprep.mubr.f32.mxu0 0.0
  %506 = vmatmul.mubr.f32.gmra.mrb[0].mxu0 %v337
  %v507 = vpop.f32.mrb[0].mxu0
  %v508 = vadd.f32 0.0, %v507
  %v509 = vpop.f32.mrb[0].mxu0
  %510 = vmatprep.mubr.f32.mxu0 0.0
  %511 = vmatmul.mubr.f32.gmra.mrb[0].mxu0 %v338
  %v512 = vpop.f32.mrb[0].mxu0
  %v513 = vadd.f32 0.0, %v512
  %v514 = vpop.f32.mrb[0].mxu0
  %515 = vmatprep.mubr.f32.mxu0 0.0
  %516 = vmatmul.mubr.f32.gmra.mrb[0].mxu0 %v339
  %v517 = vpop.f32.mrb[0].mxu0
  %v518 = vadd.f32 0.0, %v517
  %v519 = vpop.f32.mrb[0].mxu0
  %520 = vmatprep.mubr.f32.mxu0 0.0
  %521 = vmatmul.mubr.f32.gmra.mrb[0].mxu0 %v340
  %v522 = vpop.f32.mrb[0].mxu0
  %v523 = vadd.f32 0.0, %v522
  %v524 = vpop.f32.mrb[0].mxu0
  %525 = vmatprep.mubr.f32.mxu0 0.0
  %526 = vmatmul.mubr.f32.gmra.mrb[0].mxu0 %v341
  %v527 = vpop.f32.mrb[0].mxu0
  %v528 = vadd.f32 0.0, %v527
  %v529 = vpop.f32.mrb[0].mxu0
  %530 = vmatprep.mubr.f32.mxu0 0.0
  %531 = vmatmul.mubr.f32.gmra.mrb[0].mxu0 %v342
  %v532 = vpop.f32.mrb[0].mxu0
  %v533 = vadd.f32 0.0, %v532
  %v534 = vpop.f32.mrb[0].mxu0
  %535 = vmatprep.mubr.f32.mxu0 0.0
  %536 = vmatmul.mubr.f32.gmra.mrb[0].mxu0 %v343
  %v537 = vpop.f32.mrb[0].mxu0
  %v538 = vadd.f32 0.0, %v537
  %v539 = vpop.f32.mrb[0].mxu0
  %540 = vmatprep.mubr.f32.mxu0 0.0
  %541 = vmatmul.mubr.f32.gmra.mrb[0].mxu0 %v344
  %v542 = vpop.f32.mrb[0].mxu0
  %v543 = vadd.f32 0.0, %v542
  %v544 = vpop.f32.mrb[0].mxu0
  %545 = vmatprep.mubr.f32.mxu0 0.0
  %546 = vmatmul.mubr.f32.gmra.mrb[0].mxu0 %v345
  %v547 = vpop.f32.mrb[0].mxu0
  %v548 = vadd.f32 0.0, %v547
  %v549 = vpop.f32.mrb[0].mxu0
  %550 = vmatprep.mubr.f32.mxu0 0.0
  %551 = vmatmul.mubr.f32.gmra.mrb[0].mxu0 %v346
  %v552 = vpop.f32.mrb[0].mxu0
  %v553 = vadd.f32 0.0, %v552
  %v554 = vpop.f32.mrb[0].mxu0
  %555 = vmatprep.mubr.f32.mxu0 0.0
  %556 = vmatmul.mubr.f32.gmra.mrb[0].mxu0 %v347
  %v557 = vpop.f32.mrb[0].mxu0
  %v558 = vadd.f32 0.0, %v557
  %v559 = vpop.f32.mrb[0].mxu0
  %560 = vmatprep.mubr.f32.mxu0 0.0
  %561 = vmatmul.mubr.f32.gmra.mrb[0].mxu0 %v348
  %v562 = vpop.f32.mrb[0].mxu0
  %v563 = vadd.f32 0.0, %v562
  %v564 = vpop.f32.mrb[0].mxu0
  %565 = vmatprep.mubr.f32.mxu0 0.0
  %566 = vmatmul.mubr.f32.gmra.mrb[0].mxu0 %v349
  %v567 = vpop.f32.mrb[0].mxu0
  %v568 = vadd.f32 0.0, %v567
  %v569 = vpop.f32.mrb[0].mxu0
  %570 = vmatprep.mubr.f32.mxu0 0.0
  %571 = vmatmul.mubr.f32.gmra.mrb[0].mxu0 %v350
  %v572 = vpop.f32.mrb[0].mxu0
  %v573 = vadd.f32 0.0, %v572
  %v574 = vpop.f32.mrb[0].mxu0
  %575 = vmatprep.mubr.f32.mxu0 0.0
  %576 = vmatmul.mubr.f32.gmra.mrb[0].mxu0 %v351
  %v577 = vpop.f32.mrb[0].mxu0
  %v578 = vadd.f32 0.0, %v577
  %v579 = vpop.f32.mrb[0].mxu0
  %580 = vmatprep.mubr.f32.mxu0 0.0
  %581 = vmatmul.mubr.f32.gmra.mrb[0].mxu0 %v352
  %v582 = vpop.f32.mrb[0].mxu0
  %v583 = vadd.f32 0.0, %v582
  %v584 = vpop.f32.mrb[0].mxu0
  %585 = vmatprep.mubr.f32.mxu0 0.0
  %586 = vmatmul.mubr.f32.gmra.mrb[0].mxu0 %v353
  %v587 = vpop.f32.mrb[0].mxu0
  %v588 = vadd.f32 0.0, %v587
  %v589 = vpop.f32.mrb[0].mxu0
  %590 = vmatprep.mubr.f32.mxu0 0.0
  %591 = vmatmul.mubr.f32.gmra.mrb[0].mxu0 %v354
  %v592 = vpop.f32.mrb[0].mxu0
  %v593 = vadd.f32 0.0, %v592
  %v594 = vpop.f32.mrb[0].mxu0
  %595 = vmatprep.mubr.f32.mxu0 0.0
  %596 = vmatmul.mubr.f32.gmra.mrb[0].mxu0 %v355
  %v597 = vpop.f32.mrb[0].mxu0
  %v598 = vadd.f32 0.0, %v597
  %v599 = vpop.f32.mrb[0].mxu0
  %600 = vdwg.mxu0
  %v601 = vld [vmem:[%s2] sm:$0xff]
  %v602 = vld [vmem:[%s2 + $0x8] sm:$0xff]
  %v603 = vld [vmem:[%s2 + $0x10] sm:$0xff]
  %v604 = vld [vmem:[%s2 + $0x18] sm:$0xff]
  %v605 = vld [vmem:[%s2 + $0x20] sm:$0xff]
  %v606 = vld [vmem:[%s2 + $0x28] sm:$0xff]
  %v607 = vld [vmem:[%s2 + $0x30] sm:$0xff]
  %v608 = vld [vmem:[%s2 + $0x38] sm:$0xff]
  %v609 = vld [vmem:[%s2 + $0x40] sm:$0xff]
  %v610 = vld [vmem:[%s2 + $0x48] sm:$0xff]
  %v611 = vld [vmem:[%s2 + $0x50] sm:$0xff]
  %v612 = vld [vmem:[%s2 + $0x58] sm:$0xff]
  %v613 = vld [vmem:[%s2 + $0x60] sm:$0xff]
  %v614 = vld [vmem:[%s2 + $0x68] sm:$0xff]
  %v615 = vld [vmem:[%s2 + $0x70] sm:$0xff]
  %v616 = vld [vmem:[%s2 + $0x78] sm:$0xff]
  %v617 = vld [vmem:[%s2 + $0x80] sm:$0xff]
  %v618 = vld [vmem:[%s2 + $0x88] sm:$0xff]
  %v619 = vld [vmem:[%s2 + $0x90] sm:$0xff]
  %v620 = vld [vmem:[%s2 + $0x98] sm:$0xff]
  %v621 = vld [vmem:[%s2 + $0xa0] sm:$0xff]
  %v622 = vld [vmem:[%s2 + $0xa8] sm:$0xff]
  %v623 = vld [vmem:[%s2 + $0xb0] sm:$0xff]
  %v624 = vld [vmem:[%s2 + $0xb8] sm:$0xff]
  %v625 = vld [vmem:[%s2 + $0xc0] sm:$0xff]
  %v626 = vld [vmem:[%s2 + $0xc8] sm:$0xff]
  %v627 = vld [vmem:[%s2 + $0xd0] sm:$0xff]
  %v628 = vld [vmem:[%s2 + $0xd8] sm:$0xff]
  %v629 = vld [vmem:[%s2 + $0xe0] sm:$0xff]
  %v630 = vld [vmem:[%s2 + $0xe8] sm:$0xff]
  %v631 = vld [vmem:[%s2 + $0xf0] sm:$0xff]
  %v632 = vld [vmem:[%s2 + $0xf8] sm:$0xff]
  %v633 = vld [vmem:[%s2 + $0x100] sm:$0xff]
  %v634 = vld [vmem:[%s2 + $0x108] sm:$0xff]
  %v635 = vld [vmem:[%s2 + $0x110] sm:$0xff]
  %v636 = vld [vmem:[%s2 + $0x118] sm:$0xff]
  %637 = vmatprep.subr.mxu0 0.0
  %638 = vmatpush1.msra.mxu0 %v23
  %639 = vmatprep.subr.mxu0 0.0
  %640 = vmatpush1.msra.mxu0 %v24
  %641 = vmatprep.subr.mxu0 0.0
  %642 = vmatpush1.msra.mxu0 %v25
  %643 = vmatprep.subr.mxu0 0.0
  %644 = vmatpush1.msra.mxu0 %v26
  %645 = vmatprep.subr.mxu0 0.0
  %646 = vmatpush1.msra.mxu0 %v27
  %647 = vmatprep.subr.mxu0 0.0
  %648 = vmatpush1.msra.mxu0 %v28
  %649 = vmatprep.subr.mxu0 0.0
  %650 = vmatpush1.msra.mxu0 %v29
  %651 = vmatprep.subr.mxu0 0.0
  %652 = vmatpush1.msra.mxu0 %v30
  %653 = vmatprep.subr.mxu0 0.0
  %654 = vmatpush1.msra.mxu0 %v31
  %655 = vmatprep.subr.mxu0 0.0
  %656 = vmatpush1.msra.mxu0 %v32
  %657 = vmatprep.subr.mxu0 0.0
  %658 = vmatpush1.msra.mxu0 %v33
  %659 = vmatprep.subr.mxu0 0.0
  %660 = vmatpush1.msra.mxu0 %v34
  %661 = vmatprep.subr.mxu0 0.0
  %662 = vmatpush1.msra.mxu0 %v35
  %663 = vmatprep.subr.mxu0 0.0
  %664 = vmatpush1.msra.mxu0 %v36
  %665 = vmatprep.subr.mxu0 0.0
  %666 = vmatpush1.msra.mxu0 %v37
  %667 = vmatprep.subr.mxu0 0.0
  %668 = vmatpush1.msra.mxu0 %v38
  %669 = vmatprep.subr.mxu0 0.0
  %670 = vmatpush1.msra.mxu0 0.0
  %671 = vmatprep.subr.mxu0 0.0
  %672 = vmatpush1.msra.mxu0 0.0
  %673 = vmatprep.subr.mxu0 0.0
  %674 = vmatpush1.msra.mxu0 0.0
  %675 = vmatprep.subr.mxu0 0.0
  %676 = vmatpush1.msra.mxu0 0.0
  %677 = vmatprep.subr.mxu0 0.0
  %678 = vmatpush1.msra.mxu0 0.0
  %679 = vmatprep.subr.mxu0 0.0
  %680 = vmatpush1.msra.mxu0 0.0
  %681 = vmatprep.subr.mxu0 0.0
  %682 = vmatpush1.msra.mxu0 0.0
  %683 = vmatprep.subr.mxu0 0.0
  %684 = vmatpush1.msra.mxu0 0.0
  %685 = vmatprep.subr.mxu0 0.0
  %686 = vmatpush1.msra.mxu0 0.0
  %687 = vmatprep.subr.mxu0 0.0
  %688 = vmatpush1.msra.mxu0 0.0
  %689 = vmatprep.subr.mxu0 0.0
  %690 = vmatpush1.msra.mxu0 0.0
  %691 = vmatprep.subr.mxu0 0.0
  %692 = vmatpush1.msra.mxu0 0.0
  %693 = vmatprep.subr.mxu0 0.0
  %694 = vmatpush1.msra.mxu0 0.0
  %695 = vmatprep.subr.mxu0 0.0
  %696 = vmatpush1.msra.mxu0 0.0
  %697 = vmatprep.subr.mxu0 0.0
  %698 = vmatpush1.msra.mxu0 0.0
  %699 = vmatprep.subr.mxu0 0.0
  %700 = vmatpush1.msra.mxu0 0.0
  %701 = vmatprep.mubr.f32.mxu0 0.0
  %702 = vmatmul.mubr.f32.gmra.mrb[0].mxu0 %v601
  %v703 = vpop.f32.mrb[0].mxu0
  %v704 = vadd.f32 0.0, %v703
  %v705 = vpop.f32.mrb[0].mxu0
  %706 = vmatprep.mubr.f32.mxu0 0.0
  %707 = vmatmul.mubr.f32.gmra.mrb[0].mxu0 %v602
  %v708 = vpop.f32.mrb[0].mxu0
  %v709 = vadd.f32 0.0, %v708
  %v710 = vpop.f32.mrb[0].mxu0
  %711 = vmatprep.mubr.f32.mxu0 0.0
  %712 = vmatmul.mubr.f32.gmra.mrb[0].mxu0 %v603
  %v713 = vpop.f32.mrb[0].mxu0
  %v714 = vadd.f32 0.0, %v713
  %v715 = vpop.f32.mrb[0].mxu0
  %716 = vmatprep.mubr.f32.mxu0 0.0
  %717 = vmatmul.mubr.f32.gmra.mrb[0].mxu0 %v604
  %v718 = vpop.f32.mrb[0].mxu0
  %v719 = vadd.f32 0.0, %v718
  %v720 = vpop.f32.mrb[0].mxu0
  %721 = vmatprep.mubr.f32.mxu0 0.0
  %722 = vmatmul.mubr.f32.gmra.mrb[0].mxu0 %v605
  %v723 = vpop.f32.mrb[0].mxu0
  %v724 = vadd.f32 0.0, %v723
  %v725 = vpop.f32.mrb[0].mxu0
  %726 = vmatprep.mubr.f32.mxu0 0.0
  %727 = vmatmul.mubr.f32.gmra.mrb[0].mxu0 %v606
  %v728 = vpop.f32.mrb[0].mxu0
  %v729 = vadd.f32 0.0, %v728
  %v730 = vpop.f32.mrb[0].mxu0
  %731 = vmatprep.mubr.f32.mxu0 0.0
  %732 = vmatmul.mubr.f32.gmra.mrb[0].mxu0 %v607
  %v733 = vpop.f32.mrb[0].mxu0
  %v734 = vadd.f32 0.0, %v733
  %v735 = vpop.f32.mrb[0].mxu0
  %736 = vmatprep.mubr.f32.mxu0 0.0
  %737 = vmatmul.mubr.f32.gmra.mrb[0].mxu0 %v608
  %v738 = vpop.f32.mrb[0].mxu0
  %v739 = vadd.f32 0.0, %v738
  %v740 = vpop.f32.mrb[0].mxu0
  %741 = vmatprep.mubr.f32.mxu0 0.0
  %742 = vmatmul.mubr.f32.gmra.mrb[0].mxu0 %v609
  %v743 = vpop.f32.mrb[0].mxu0
  %v744 = vadd.f32 0.0, %v743
  %v745 = vpop.f32.mrb[0].mxu0
  %746 = vmatprep.mubr.f32.mxu0 0.0
  %747 = vmatmul.mubr.f32.gmra.mrb[0].mxu0 %v610
  %v748 = vpop.f32.mrb[0].mxu0
  %v749 = vadd.f32 0.0, %v748
  %v750 = vpop.f32.mrb[0].mxu0
  %751 = vmatprep.mubr.f32.mxu0 0.0
  %752 = vmatmul.mubr.f32.gmra.mrb[0].mxu0 %v611
  %v753 = vpop.f32.mrb[0].mxu0
  %v754 = vadd.f32 0.0, %v753
  %v755 = vpop.f32.mrb[0].mxu0
  %756 = vmatprep.mubr.f32.mxu0 0.0
  %757 = vmatmul.mubr.f32.gmra.mrb[0].mxu0 %v612
  %v758 = vpop.f32.mrb[0].mxu0
  %v759 = vadd.f32 0.0, %v758
  %v760 = vpop.f32.mrb[0].mxu0
  %761 = vmatprep.mubr.f32.mxu0 0.0
  %762 = vmatmul.mubr.f32.gmra.mrb[0].mxu0 %v613
  %v763 = vpop.f32.mrb[0].mxu0
  %v764 = vadd.f32 0.0, %v763
  %v765 = vpop.f32.mrb[0].mxu0
  %766 = vmatprep.mubr.f32.mxu0 0.0
  %767 = vmatmul.mubr.f32.gmra.mrb[0].mxu0 %v614
  %v768 = vpop.f32.mrb[0].mxu0
  %v769 = vadd.f32 0.0, %v768
  %v770 = vpop.f32.mrb[0].mxu0
  %771 = vmatprep.mubr.f32.mxu0 0.0
  %772 = vmatmul.mubr.f32.gmra.mrb[0].mxu0 %v615
  %v773 = vpop.f32.mrb[0].mxu0
  %v774 = vadd.f32 0.0, %v773
  %v775 = vpop.f32.mrb[0].mxu0
  %776 = vmatprep.mubr.f32.mxu0 0.0
  %777 = vmatmul.mubr.f32.gmra.mrb[0].mxu0 %v616
  %v778 = vpop.f32.mrb[0].mxu0
  %v779 = vadd.f32 0.0, %v778
  %v780 = vpop.f32.mrb[0].mxu0
  %781 = vmatprep.mubr.f32.mxu0 0.0
  %782 = vmatmul.mubr.f32.gmra.mrb[0].mxu0 %v617
  %v783 = vpop.f32.mrb[0].mxu0
  %v784 = vadd.f32 0.0, %v783
  %v785 = vpop.f32.mrb[0].mxu0
  %786 = vmatprep.mubr.f32.mxu0 0.0
  %787 = vmatmul.mubr.f32.gmra.mrb[0].mxu0 %v618
  %v788 = vpop.f32.mrb[0].mxu0
  %v789 = vadd.f32 0.0, %v788
  %v790 = vpop.f32.mrb[0].mxu0
  %791 = vmatprep.mubr.f32.mxu0 0.0
  %792 = vmatmul.mubr.f32.gmra.mrb[0].mxu0 %v619
  %v793 = vpop.f32.mrb[0].mxu0
  %v794 = vadd.f32 0.0, %v793
  %v795 = vpop.f32.mrb[0].mxu0
  %796 = vmatprep.mubr.f32.mxu0 0.0
  %797 = vmatmul.mubr.f32.gmra.mrb[0].mxu0 %v620
  %v798 = vpop.f32.mrb[0].mxu0
  %v799 = vadd.f32 0.0, %v798
  %v800 = vpop.f32.mrb[0].mxu0
  %801 = vmatprep.mubr.f32.mxu0 0.0
  %802 = vmatmul.mubr.f32.gmra.mrb[0].mxu0 %v621
  %v803 = vpop.f32.mrb[0].mxu0
  %v804 = vadd.f32 0.0, %v803
  %v805 = vpop.f32.mrb[0].mxu0
  %806 = vmatprep.mubr.f32.mxu0 0.0
  %807 = vmatmul.mubr.f32.gmra.mrb[0].mxu0 %v622
  %v808 = vpop.f32.mrb[0].mxu0
  %v809 = vadd.f32 0.0, %v808
  %v810 = vpop.f32.mrb[0].mxu0
  %811 = vmatprep.mubr.f32.mxu0 0.0
  %812 = vmatmul.mubr.f32.gmra.mrb[0].mxu0 %v623
  %v813 = vpop.f32.mrb[0].mxu0
  %v814 = vadd.f32 0.0, %v813
  %v815 = vpop.f32.mrb[0].mxu0
  %816 = vmatprep.mubr.f32.mxu0 0.0
  %817 = vmatmul.mubr.f32.gmra.mrb[0].mxu0 %v624
  %v818 = vpop.f32.mrb[0].mxu0
  %v819 = vadd.f32 0.0, %v818
  %v820 = vpop.f32.mrb[0].mxu0
  %821 = vmatprep.mubr.f32.mxu0 0.0
  %822 = vmatmul.mubr.f32.gmra.mrb[0].mxu0 %v625
  %v823 = vpop.f32.mrb[0].mxu0
  %v824 = vadd.f32 0.0, %v823
  %v825 = vpop.f32.mrb[0].mxu0
  %826 = vmatprep.mubr.f32.mxu0 0.0
  %827 = vmatmul.mubr.f32.gmra.mrb[0].mxu0 %v626
  %v828 = vpop.f32.mrb[0].mxu0
  %v829 = vadd.f32 0.0, %v828
  %v830 = vpop.f32.mrb[0].mxu0
  %831 = vmatprep.mubr.f32.mxu0 0.0
  %832 = vmatmul.mubr.f32.gmra.mrb[0].mxu0 %v627
  %v833 = vpop.f32.mrb[0].mxu0
  %v834 = vadd.f32 0.0, %v833
  %v835 = vpop.f32.mrb[0].mxu0
  %836 = vmatprep.mubr.f32.mxu0 0.0
  %837 = vmatmul.mubr.f32.gmra.mrb[0].mxu0 %v628
  %v838 = vpop.f32.mrb[0].mxu0
  %v839 = vadd.f32 0.0, %v838
  %v840 = vpop.f32.mrb[0].mxu0
  %841 = vmatprep.mubr.f32.mxu0 0.0
  %842 = vmatmul.mubr.f32.gmra.mrb[0].mxu0 %v629
  %v843 = vpop.f32.mrb[0].mxu0
  %v844 = vadd.f32 0.0, %v843
  %v845 = vpop.f32.mrb[0].mxu0
  %846 = vmatprep.mubr.f32.mxu0 0.0
  %847 = vmatmul.mubr.f32.gmra.mrb[0].mxu0 %v630
  %v848 = vpop.f32.mrb[0].mxu0
  %v849 = vadd.f32 0.0, %v848
  %v850 = vpop.f32.mrb[0].mxu0
  %851 = vmatprep.mubr.f32.mxu0 0.0
  %852 = vmatmul.mubr.f32.gmra.mrb[0].mxu0 %v631
  %v853 = vpop.f32.mrb[0].mxu0
  %v854 = vadd.f32 0.0, %v853
  %v855 = vpop.f32.mrb[0].mxu0
  %856 = vmatprep.mubr.f32.mxu0 0.0
  %857 = vmatmul.mubr.f32.gmra.mrb[0].mxu0 %v632
  %v858 = vpop.f32.mrb[0].mxu0
  %v859 = vadd.f32 0.0, %v858
  %v860 = vpop.f32.mrb[0].mxu0
  %861 = vmatprep.mubr.f32.mxu0 0.0
  %862 = vmatmul.mubr.f32.gmra.mrb[0].mxu0 %v633
  %v863 = vpop.f32.mrb[0].mxu0
  %v864 = vadd.f32 0.0, %v863
  %v865 = vpop.f32.mrb[0].mxu0
  %866 = vmatprep.mubr.f32.mxu0 0.0
  %867 = vmatmul.mubr.f32.gmra.mrb[0].mxu0 %v634
  %v868 = vpop.f32.mrb[0].mxu0
  %v869 = vadd.f32 0.0, %v868
  %v870 = vpop.f32.mrb[0].mxu0
  %871 = vmatprep.mubr.f32.mxu0 0.0
  %872 = vmatmul.mubr.f32.gmra.mrb[0].mxu0 %v635
  %v873 = vpop.f32.mrb[0].mxu0
  %v874 = vadd.f32 0.0, %v873
  %v875 = vpop.f32.mrb[0].mxu0
  %876 = vmatprep.mubr.f32.mxu0 0.0
  %877 = vmatmul.mubr.f32.gmra.mrb[0].mxu0 %v636
  %v878 = vpop.f32.mrb[0].mxu0
  %v879 = vadd.f32 0.0, %v878
  %v880 = vpop.f32.mrb[0].mxu0
  %881 = vdwg.mxu0
  %v882 = vld [vmem:[%s3] sm:$0xff]
  %v883 = vld [vmem:[%s3 + $0x8] sm:$0xff]
  %v884 = vld [vmem:[%s3 + $0x10] sm:$0xff]
  %v885 = vld [vmem:[%s3 + $0x18] sm:$0xff]
  %v886 = vld [vmem:[%s3 + $0x20] sm:$0xff]
  %v887 = vld [vmem:[%s3 + $0x28] sm:$0xff]
  %v888 = vld [vmem:[%s3 + $0x30] sm:$0xff]
  %v889 = vld [vmem:[%s3 + $0x38] sm:$0xff]
  %v890 = vld [vmem:[%s3 + $0x40] sm:$0xff]
  %v891 = vld [vmem:[%s3 + $0x48] sm:$0xff]
  %v892 = vld [vmem:[%s3 + $0x50] sm:$0xff]
  %v893 = vld [vmem:[%s3 + $0x58] sm:$0xff]
  %v894 = vld [vmem:[%s3 + $0x60] sm:$0xff]
  %v895 = vld [vmem:[%s3 + $0x68] sm:$0xff]
  %v896 = vld [vmem:[%s3 + $0x70] sm:$0xff]
  %v897 = vld [vmem:[%s3 + $0x78] sm:$0xff]
  %v898 = vld [vmem:[%s3 + $0x80] sm:$0xff]
  %v899 = vld [vmem:[%s3 + $0x88] sm:$0xff]
  %v900 = vld [vmem:[%s3 + $0x90] sm:$0xff]
  %v901 = vld [vmem:[%s3 + $0x98] sm:$0xff]
  %v902 = vld [vmem:[%s3 + $0xa0] sm:$0xff]
  %v903 = vld [vmem:[%s3 + $0xa8] sm:$0xff]
  %v904 = vld [vmem:[%s3 + $0xb0] sm:$0xff]
  %v905 = vld [vmem:[%s3 + $0xb8] sm:$0xff]
  %v906 = vld [vmem:[%s3 + $0xc0] sm:$0xff]
  %v907 = vld [vmem:[%s3 + $0xc8] sm:$0xff]
  %v908 = vld [vmem:[%s3 + $0xd0] sm:$0xff]
  %v909 = vld [vmem:[%s3 + $0xd8] sm:$0xff]
  %v910 = vld [vmem:[%s3 + $0xe0] sm:$0xff]
  %v911 = vld [vmem:[%s3 + $0xe8] sm:$0xff]
  %v912 = vld [vmem:[%s3 + $0xf0] sm:$0xff]
  %v913 = vld [vmem:[%s3 + $0xf8] sm:$0xff]
  %v914 = vld [vmem:[%s3 + $0x100] sm:$0xff]
  %v915 = vld [vmem:[%s3 + $0x108] sm:$0xff]
  %v916 = vld [vmem:[%s3 + $0x110] sm:$0xff]
  %v917 = vld [vmem:[%s3 + $0x118] sm:$0xff]
  %918 = vmatprep.subr.mxu0 0.0
  %919 = vmatpush1.msra.mxu0 %v23
  %920 = vmatprep.subr.mxu0 0.0
  %921 = vmatpush1.msra.mxu0 %v24
  %922 = vmatprep.subr.mxu0 0.0
  %923 = vmatpush1.msra.mxu0 %v25
  %924 = vmatprep.subr.mxu0 0.0
  %925 = vmatpush1.msra.mxu0 %v26
  %926 = vmatprep.subr.mxu0 0.0
  %927 = vmatpush1.msra.mxu0 %v27
  %928 = vmatprep.subr.mxu0 0.0
  %929 = vmatpush1.msra.mxu0 %v28
  %930 = vmatprep.subr.mxu0 0.0
  %931 = vmatpush1.msra.mxu0 %v29
  %932 = vmatprep.subr.mxu0 0.0
  %933 = vmatpush1.msra.mxu0 %v30
  %934 = vmatprep.subr.mxu0 0.0
  %935 = vmatpush1.msra.mxu0 %v31
  %936 = vmatprep.subr.mxu0 0.0
  %937 = vmatpush1.msra.mxu0 %v32
  %938 = vmatprep.subr.mxu0 0.0
  %939 = vmatpush1.msra.mxu0 %v33
  %940 = vmatprep.subr.mxu0 0.0
  %941 = vmatpush1.msra.mxu0 %v34
  %942 = vmatprep.subr.mxu0 0.0
  %943 = vmatpush1.msra.mxu0 %v35
  %944 = vmatprep.subr.mxu0 0.0
  %945 = vmatpush1.msra.mxu0 %v36
  %946 = vmatprep.subr.mxu0 0.0
  %947 = vmatpush1.msra.mxu0 %v37
  %948 = vmatprep.subr.mxu0 0.0
  %949 = vmatpush1.msra.mxu0 %v38
  %950 = vmatprep.subr.mxu0 0.0
  %951 = vmatpush1.msra.mxu0 0.0
  %952 = vmatprep.subr.mxu0 0.0
  %953 = vmatpush1.msra.mxu0 0.0
  %954 = vmatprep.subr.mxu0 0.0
  %955 = vmatpush1.msra.mxu0 0.0
  %956 = vmatprep.subr.mxu0 0.0
  %957 = vmatpush1.msra.mxu0 0.0
  %958 = vmatprep.subr.mxu0 0.0
  %959 = vmatpush1.msra.mxu0 0.0
  %960 = vmatprep.subr.mxu0 0.0
  %961 = vmatpush1.msra.mxu0 0.0
  %962 = vmatprep.subr.mxu0 0.0
  %963 = vmatpush1.msra.mxu0 0.0
  %964 = vmatprep.subr.mxu0 0.0
  %965 = vmatpush1.msra.mxu0 0.0
  %966 = vmatprep.subr.mxu0 0.0
  %967 = vmatpush1.msra.mxu0 0.0
  %968 = vmatprep.subr.mxu0 0.0
  %969 = vmatpush1.msra.mxu0 0.0
  %970 = vmatprep.subr.mxu0 0.0
  %971 = vmatpush1.msra.mxu0 0.0
  %972 = vmatprep.subr.mxu0 0.0
  %973 = vmatpush1.msra.mxu0 0.0
  %974 = vmatprep.subr.mxu0 0.0
  %975 = vmatpush1.msra.mxu0 0.0
  %976 = vmatprep.subr.mxu0 0.0
  %977 = vmatpush1.msra.mxu0 0.0
  %978 = vmatprep.subr.mxu0 0.0
  %979 = vmatpush1.msra.mxu0 0.0
  %980 = vmatprep.subr.mxu0 0.0
  %981 = vmatpush1.msra.mxu0 0.0
  %982 = vmatprep.mubr.f32.mxu0 0.0
  %983 = vmatmul.mubr.f32.gmra.mrb[0].mxu0 %v882
  %v984 = vpop.f32.mrb[0].mxu0
  %v985 = vadd.f32 0.0, %v984
  %v986 = vpop.f32.mrb[0].mxu0
  %987 = vmatprep.mubr.f32.mxu0 0.0
  %988 = vmatmul.mubr.f32.gmra.mrb[0].mxu0 %v883
  %v989 = vpop.f32.mrb[0].mxu0
  %v990 = vadd.f32 0.0, %v989
  %v991 = vpop.f32.mrb[0].mxu0
  %992 = vmatprep.mubr.f32.mxu0 0.0
  %993 = vmatmul.mubr.f32.gmra.mrb[0].mxu0 %v884
  %v994 = vpop.f32.mrb[0].mxu0
  %v995 = vadd.f32 0.0, %v994
  %v996 = vpop.f32.mrb[0].mxu0
  %997 = vmatprep.mubr.f32.mxu0 0.0
  %998 = vmatmul.mubr.f32.gmra.mrb[0].mxu0 %v885
  %v999 = vpop.f32.mrb[0].mxu0
  %v1000 = vadd.f32 0.0, %v999
  %v1001 = vpop.f32.mrb[0].mxu0
  %1002 = vmatprep.mubr.f32.mxu0 0.0
  %1003 = vmatmul.mubr.f32.gmra.mrb[0].mxu0 %v886
  %v1004 = vpop.f32.mrb[0].mxu0
  %v1005 = vadd.f32 0.0, %v1004
  %v1006 = vpop.f32.mrb[0].mxu0
  %1007 = vmatprep.mubr.f32.mxu0 0.0
  %1008 = vmatmul.mubr.f32.gmra.mrb[0].mxu0 %v887
  %v1009 = vpop.f32.mrb[0].mxu0
  %v1010 = vadd.f32 0.0, %v1009
  %v1011 = vpop.f32.mrb[0].mxu0
  %1012 = vmatprep.mubr.f32.mxu0 0.0
  %1013 = vmatmul.mubr.f32.gmra.mrb[0].mxu0 %v888
  %v1014 = vpop.f32.mrb[0].mxu0
  %v1015 = vadd.f32 0.0, %v1014
  %v1016 = vpop.f32.mrb[0].mxu0
  %1017 = vmatprep.mubr.f32.mxu0 0.0
  %1018 = vmatmul.mubr.f32.gmra.mrb[0].mxu0 %v889
  %v1019 = vpop.f32.mrb[0].mxu0
  %v1020 = vadd.f32 0.0, %v1019
  %v1021 = vpop.f32.mrb[0].mxu0
  %1022 = vmatprep.mubr.f32.mxu0 0.0
  %1023 = vmatmul.mubr.f32.gmra.mrb[0].mxu0 %v890
  %v1024 = vpop.f32.mrb[0].mxu0
  %v1025 = vadd.f32 0.0, %v1024
  %v1026 = vpop.f32.mrb[0].mxu0
  %1027 = vmatprep.mubr.f32.mxu0 0.0
  %1028 = vmatmul.mubr.f32.gmra.mrb[0].mxu0 %v891
  %v1029 = vpop.f32.mrb[0].mxu0
  %v1030 = vadd.f32 0.0, %v1029
  %v1031 = vpop.f32.mrb[0].mxu0
  %1032 = vmatprep.mubr.f32.mxu0 0.0
  %1033 = vmatmul.mubr.f32.gmra.mrb[0].mxu0 %v892
  %v1034 = vpop.f32.mrb[0].mxu0
  %v1035 = vadd.f32 0.0, %v1034
  %v1036 = vpop.f32.mrb[0].mxu0
  %1037 = vmatprep.mubr.f32.mxu0 0.0
  %1038 = vmatmul.mubr.f32.gmra.mrb[0].mxu0 %v893
  %v1039 = vpop.f32.mrb[0].mxu0
  %v1040 = vadd.f32 0.0, %v1039
  %v1041 = vpop.f32.mrb[0].mxu0
  %1042 = vmatprep.mubr.f32.mxu0 0.0
  %1043 = vmatmul.mubr.f32.gmra.mrb[0].mxu0 %v894
  %v1044 = vpop.f32.mrb[0].mxu0
  %v1045 = vadd.f32 0.0, %v1044
  %v1046 = vpop.f32.mrb[0].mxu0
  %1047 = vmatprep.mubr.f32.mxu0 0.0
  %1048 = vmatmul.mubr.f32.gmra.mrb[0].mxu0 %v895
  %v1049 = vpop.f32.mrb[0].mxu0
  %v1050 = vadd.f32 0.0, %v1049
  %v1051 = vpop.f32.mrb[0].mxu0
  %1052 = vmatprep.mubr.f32.mxu0 0.0
  %1053 = vmatmul.mubr.f32.gmra.mrb[0].mxu0 %v896
  %v1054 = vpop.f32.mrb[0].mxu0
  %v1055 = vadd.f32 0.0, %v1054
  %v1056 = vpop.f32.mrb[0].mxu0
  %1057 = vmatprep.mubr.f32.mxu0 0.0
  %1058 = vmatmul.mubr.f32.gmra.mrb[0].mxu0 %v897
  %v1059 = vpop.f32.mrb[0].mxu0
  %v1060 = vadd.f32 0.0, %v1059
  %v1061 = vpop.f32.mrb[0].mxu0
  %1062 = vmatprep.mubr.f32.mxu0 0.0
  %1063 = vmatmul.mubr.f32.gmra.mrb[0].mxu0 %v898
  %v1064 = vpop.f32.mrb[0].mxu0
  %v1065 = vadd.f32 0.0, %v1064
  %v1066 = vpop.f32.mrb[0].mxu0
  %1067 = vmatprep.mubr.f32.mxu0 0.0
  %1068 = vmatmul.mubr.f32.gmra.mrb[0].mxu0 %v899
  %v1069 = vpop.f32.mrb[0].mxu0
  %v1070 = vadd.f32 0.0, %v1069
  %v1071 = vpop.f32.mrb[0].mxu0
  %1072 = vmatprep.mubr.f32.mxu0 0.0
  %1073 = vmatmul.mubr.f32.gmra.mrb[0].mxu0 %v900
  %v1074 = vpop.f32.mrb[0].mxu0
  %v1075 = vadd.f32 0.0, %v1074
  %v1076 = vpop.f32.mrb[0].mxu0
  %1077 = vmatprep.mubr.f32.mxu0 0.0
  %1078 = vmatmul.mubr.f32.gmra.mrb[0].mxu0 %v901
  %v1079 = vpop.f32.mrb[0].mxu0
  %v1080 = vadd.f32 0.0, %v1079
  %v1081 = vpop.f32.mrb[0].mxu0
  %1082 = vmatprep.mubr.f32.mxu0 0.0
  %1083 = vmatmul.mubr.f32.gmra.mrb[0].mxu0 %v902
  %v1084 = vpop.f32.mrb[0].mxu0
  %v1085 = vadd.f32 0.0, %v1084
  %v1086 = vpop.f32.mrb[0].mxu0
  %1087 = vmatprep.mubr.f32.mxu0 0.0
  %1088 = vmatmul.mubr.f32.gmra.mrb[0].mxu0 %v903
  %v1089 = vpop.f32.mrb[0].mxu0
  %v1090 = vadd.f32 0.0, %v1089
  %v1091 = vpop.f32.mrb[0].mxu0
  %1092 = vmatprep.mubr.f32.mxu0 0.0
  %1093 = vmatmul.mubr.f32.gmra.mrb[0].mxu0 %v904
  %v1094 = vpop.f32.mrb[0].mxu0
  %v1095 = vadd.f32 0.0, %v1094
  %v1096 = vpop.f32.mrb[0].mxu0
  %1097 = vmatprep.mubr.f32.mxu0 0.0
  %1098 = vmatmul.mubr.f32.gmra.mrb[0].mxu0 %v905
  %v1099 = vpop.f32.mrb[0].mxu0
  %v1100 = vadd.f32 0.0, %v1099
  %v1101 = vpop.f32.mrb[0].mxu0
  %1102 = vmatprep.mubr.f32.mxu0 0.0
  %1103 = vmatmul.mubr.f32.gmra.mrb[0].mxu0 %v906
  %v1104 = vpop.f32.mrb[0].mxu0
  %v1105 = vadd.f32 0.0, %v1104
  %v1106 = vpop.f32.mrb[0].mxu0
  %1107 = vmatprep.mubr.f32.mxu0 0.0
  %1108 = vmatmul.mubr.f32.gmra.mrb[0].mxu0 %v907
  %v1109 = vpop.f32.mrb[0].mxu0
  %v1110 = vadd.f32 0.0, %v1109
  %v1111 = vpop.f32.mrb[0].mxu0
  %1112 = vmatprep.mubr.f32.mxu0 0.0
  %1113 = vmatmul.mubr.f32.gmra.mrb[0].mxu0 %v908
  %v1114 = vpop.f32.mrb[0].mxu0
  %v1115 = vadd.f32 0.0, %v1114
  %v1116 = vpop.f32.mrb[0].mxu0
  %1117 = vmatprep.mubr.f32.mxu0 0.0
  %1118 = vmatmul.mubr.f32.gmra.mrb[0].mxu0 %v909
  %v1119 = vpop.f32.mrb[0].mxu0
  %v1120 = vadd.f32 0.0, %v1119
  %v1121 = vpop.f32.mrb[0].mxu0
  %1122 = vmatprep.mubr.f32.mxu0 0.0
  %1123 = vmatmul.mubr.f32.gmra.mrb[0].mxu0 %v910
  %v1124 = vpop.f32.mrb[0].mxu0
  %v1125 = vadd.f32 0.0, %v1124
  %v1126 = vpop.f32.mrb[0].mxu0
  %1127 = vmatprep.mubr.f32.mxu0 0.0
  %1128 = vmatmul.mubr.f32.gmra.mrb[0].mxu0 %v911
  %v1129 = vpop.f32.mrb[0].mxu0
  %v1130 = vadd.f32 0.0, %v1129
  %v1131 = vpop.f32.mrb[0].mxu0
  %1132 = vmatprep.mubr.f32.mxu0 0.0
  %1133 = vmatmul.mubr.f32.gmra.mrb[0].mxu0 %v912
  %v1134 = vpop.f32.mrb[0].mxu0
  %v1135 = vadd.f32 0.0, %v1134
  %v1136 = vpop.f32.mrb[0].mxu0
  %1137 = vmatprep.mubr.f32.mxu0 0.0
  %1138 = vmatmul.mubr.f32.gmra.mrb[0].mxu0 %v913
  %v1139 = vpop.f32.mrb[0].mxu0
  %v1140 = vadd.f32 0.0, %v1139
  %v1141 = vpop.f32.mrb[0].mxu0
  %1142 = vmatprep.mubr.f32.mxu0 0.0
  %1143 = vmatmul.mubr.f32.gmra.mrb[0].mxu0 %v914
  %v1144 = vpop.f32.mrb[0].mxu0
  %v1145 = vadd.f32 0.0, %v1144
  %v1146 = vpop.f32.mrb[0].mxu0
  %1147 = vmatprep.mubr.f32.mxu0 0.0
  %1148 = vmatmul.mubr.f32.gmra.mrb[0].mxu0 %v915
  %v1149 = vpop.f32.mrb[0].mxu0
  %v1150 = vadd.f32 0.0, %v1149
  %v1151 = vpop.f32.mrb[0].mxu0
  %1152 = vmatprep.mubr.f32.mxu0 0.0
  %1153 = vmatmul.mubr.f32.gmra.mrb[0].mxu0 %v916
  %v1154 = vpop.f32.mrb[0].mxu0
  %v1155 = vadd.f32 0.0, %v1154
  %v1156 = vpop.f32.mrb[0].mxu0
  %1157 = vmatprep.mubr.f32.mxu0 0.0
  %1158 = vmatmul.mubr.f32.gmra.mrb[0].mxu0 %v917
  %v1159 = vpop.f32.mrb[0].mxu0
  %v1160 = vadd.f32 0.0, %v1159
  %v1161 = vpop.f32.mrb[0].mxu0
  %1162 = vdwg.mxu0
  %v1163 = vmax.f32 %v142, %v423
  %v1164 = vmax.f32 %v147, %v428
  %v1165 = vmax.f32 %v152, %v433
  %v1166 = vmax.f32 %v157, %v438
  %v1167 = vmax.f32 %v162, %v443
  %v1168 = vmax.f32 %v167, %v448
  %v1169 = vmax.f32 %v172, %v453
  %v1170 = vmax.f32 %v177, %v458
  %v1171 = vmax.f32 %v182, %v463
  %v1172 = vmax.f32 %v187, %v468
  %v1173 = vmax.f32 %v192, %v473
  %v1174 = vmax.f32 %v197, %v478
  %v1175 = vmax.f32 %v202, %v483
  %v1176 = vmax.f32 %v207, %v488
  %v1177 = vmax.f32 %v212, %v493
  %v1178 = vmax.f32 %v217, %v498
  %v1179 = vmax.f32 %v222, %v503
  %v1180 = vmax.f32 %v227, %v508
  %v1181 = vmax.f32 %v232, %v513
  %v1182 = vmax.f32 %v237, %v518
  %v1183 = vmax.f32 %v242, %v523
  %v1184 = vmax.f32 %v247, %v528
  %v1185 = vmax.f32 %v252, %v533
  %v1186 = vmax.f32 %v257, %v538
  %v1187 = vmax.f32 %v262, %v543
  %v1188 = vmax.f32 %v267, %v548
  %v1189 = vmax.f32 %v272, %v553
  %v1190 = vmax.f32 %v277, %v558
  %v1191 = vmax.f32 %v282, %v563
  %v1192 = vmax.f32 %v287, %v568
  %v1193 = vmax.f32 %v292, %v573
  %v1194 = vmax.f32 %v297, %v578
  %v1195 = vmax.f32 %v302, %v583
  %v1196 = vmax.f32 %v307, %v588
  %v1197 = vmax.f32 %v312, %v593
  %v1198 = vmax.f32 %v317, %v598
  %v1199 = vmax.f32 %v704, %v985
  %v1200 = vmax.f32 %v709, %v990
  %v1201 = vmax.f32 %v714, %v995
  %v1202 = vmax.f32 %v719, %v1000
  %v1203 = vmax.f32 %v724, %v1005
  %v1204 = vmax.f32 %v729, %v1010
  %v1205 = vmax.f32 %v734, %v1015
  %v1206 = vmax.f32 %v739, %v1020
  %v1207 = vmax.f32 %v744, %v1025
  %v1208 = vmax.f32 %v749, %v1030
  %v1209 = vmax.f32 %v754, %v1035
  %v1210 = vmax.f32 %v759, %v1040
  %v1211 = vmax.f32 %v764, %v1045
  %v1212 = vmax.f32 %v769, %v1050
  %v1213 = vmax.f32 %v774, %v1055
  %v1214 = vmax.f32 %v779, %v1060
  %v1215 = vmax.f32 %v784, %v1065
  %v1216 = vmax.f32 %v789, %v1070
  %v1217 = vmax.f32 %v794, %v1075
  %v1218 = vmax.f32 %v799, %v1080
  %v1219 = vmax.f32 %v804, %v1085
  %v1220 = vmax.f32 %v809, %v1090
  %v1221 = vmax.f32 %v814, %v1095
  %v1222 = vmax.f32 %v819, %v1100
  %v1223 = vmax.f32 %v824, %v1105
  %v1224 = vmax.f32 %v829, %v1110
  %v1225 = vmax.f32 %v834, %v1115
  %v1226 = vmax.f32 %v839, %v1120
  %v1227 = vmax.f32 %v844, %v1125
  %v1228 = vmax.f32 %v849, %v1130
  %v1229 = vmax.f32 %v854, %v1135
  %v1230 = vmax.f32 %v859, %v1140
  %v1231 = vmax.f32 %v864, %v1145
  %v1232 = vmax.f32 %v869, %v1150
  %v1233 = vmax.f32 %v874, %v1155
  %v1234 = vmax.f32 %v879, %v1160
  %v1235 = vmax.f32 %v1163, %v1199
  %v1236 = vmax.f32 %v1164, %v1200
  %v1237 = vmax.f32 %v1165, %v1201
  %v1238 = vmax.f32 %v1166, %v1202
  %v1239 = vmax.f32 %v1167, %v1203
  %v1240 = vmax.f32 %v1168, %v1204
  %v1241 = vmax.f32 %v1169, %v1205
  %v1242 = vmax.f32 %v1170, %v1206
  %v1243 = vmax.f32 %v1171, %v1207
  %v1244 = vmax.f32 %v1172, %v1208
  %v1245 = vmax.f32 %v1173, %v1209
  %v1246 = vmax.f32 %v1174, %v1210
  %v1247 = vmax.f32 %v1175, %v1211
  %v1248 = vmax.f32 %v1176, %v1212
  %v1249 = vmax.f32 %v1177, %v1213
  %v1250 = vmax.f32 %v1178, %v1214
  %v1251 = vmax.f32 %v1179, %v1215
  %v1252 = vmax.f32 %v1180, %v1216
  %v1253 = vmax.f32 %v1181, %v1217
  %v1254 = vmax.f32 %v1182, %v1218
  %v1255 = vmax.f32 %v1183, %v1219
  %v1256 = vmax.f32 %v1184, %v1220
  %v1257 = vmax.f32 %v1185, %v1221
  %v1258 = vmax.f32 %v1186, %v1222
  %v1259 = vmax.f32 %v1187, %v1223
  %v1260 = vmax.f32 %v1188, %v1224
  %v1261 = vmax.f32 %v1189, %v1225
  %v1262 = vmax.f32 %v1190, %v1226
  %v1263 = vmax.f32 %v1191, %v1227
  %v1264 = vmax.f32 %v1192, %v1228
  %v1265 = vmax.f32 %v1193, %v1229
  %v1266 = vmax.f32 %v1194, %v1230
  %v1267 = vmax.f32 %v1195, %v1231
  %v1268 = vmax.f32 %v1196, %v1232
  %v1269 = vmax.f32 %v1197, %v1233
  %v1270 = vmax.f32 %v1198, %v1234
  %v1271 = vld [vmem:[%s5] sm:$0x1]
  %v1273 = vlaneseq
  %v1274 = vshrl.u32 %v1273, 7
  %v1275 = vsub.s32 0, %v1274
  %v1276 = vrot.slane %v1271, %v1275
  %v1278 = vadd.f32 %v1235, %v1276
  %v1279 = vadd.f32 %v1236, %v1276
  %v1280 = vadd.f32 %v1237, %v1276
  %v1281 = vadd.f32 %v1238, %v1276
  %v1282 = vadd.f32 %v1239, %v1276
  %v1283 = vadd.f32 %v1240, %v1276
  %v1284 = vadd.f32 %v1241, %v1276
  %v1285 = vadd.f32 %v1242, %v1276
  %v1286 = vadd.f32 %v1243, %v1276
  %v1287 = vadd.f32 %v1244, %v1276
  %v1288 = vadd.f32 %v1245, %v1276
  %v1289 = vadd.f32 %v1246, %v1276
  %v1290 = vadd.f32 %v1247, %v1276
  %v1291 = vadd.f32 %v1248, %v1276
  %v1292 = vadd.f32 %v1249, %v1276
  %v1293 = vadd.f32 %v1250, %v1276
  %v1294 = vadd.f32 %v1251, %v1276
  %v1295 = vadd.f32 %v1252, %v1276
  %v1296 = vadd.f32 %v1253, %v1276
  %v1297 = vadd.f32 %v1254, %v1276
  %v1298 = vadd.f32 %v1255, %v1276
  %v1299 = vadd.f32 %v1256, %v1276
  %v1300 = vadd.f32 %v1257, %v1276
  %v1301 = vadd.f32 %v1258, %v1276
  %v1302 = vadd.f32 %v1259, %v1276
  %v1303 = vadd.f32 %v1260, %v1276
  %v1304 = vadd.f32 %v1261, %v1276
  %v1305 = vadd.f32 %v1262, %v1276
  %v1306 = vadd.f32 %v1263, %v1276
  %v1307 = vadd.f32 %v1264, %v1276
  %v1308 = vadd.f32 %v1265, %v1276
  %v1309 = vadd.f32 %v1266, %v1276
  %v1310 = vadd.f32 %v1267, %v1276
  %v1311 = vadd.f32 %v1268, %v1276
  %v1312 = vadd.f32 %v1269, %v1276
  %v1313 = vadd.f32 %v1270, %v1276
  %v1314 = vmax.f32 %v1278, 0.0
  %v1315 = vmax.f32 %v1279, 0.0
  %v1316 = vmax.f32 %v1280, 0.0
  %v1317 = vmax.f32 %v1281, 0.0
  %v1318 = vmax.f32 %v1282, 0.0
  %v1319 = vmax.f32 %v1283, 0.0
  %v1320 = vmax.f32 %v1284, 0.0
  %v1321 = vmax.f32 %v1285, 0.0
  %v1322 = vmax.f32 %v1286, 0.0
  %v1323 = vmax.f32 %v1287, 0.0
  %v1324 = vmax.f32 %v1288, 0.0
  %v1325 = vmax.f32 %v1289, 0.0
  %v1326 = vmax.f32 %v1290, 0.0
  %v1327 = vmax.f32 %v1291, 0.0
  %v1328 = vmax.f32 %v1292, 0.0
  %v1329 = vmax.f32 %v1293, 0.0
  %v1330 = vmax.f32 %v1294, 0.0
  %v1331 = vmax.f32 %v1295, 0.0
  %v1332 = vmax.f32 %v1296, 0.0
  %v1333 = vmax.f32 %v1297, 0.0
  %v1334 = vmax.f32 %v1298, 0.0
  %v1335 = vmax.f32 %v1299, 0.0
  %v1336 = vmax.f32 %v1300, 0.0
  %v1337 = vmax.f32 %v1301, 0.0
  %v1338 = vmax.f32 %v1302, 0.0
  %v1339 = vmax.f32 %v1303, 0.0
  %v1340 = vmax.f32 %v1304, 0.0
  %v1341 = vmax.f32 %v1305, 0.0
  %v1342 = vmax.f32 %v1306, 0.0
  %v1343 = vmax.f32 %v1307, 0.0
  %v1344 = vmax.f32 %v1308, 0.0
  %v1345 = vmax.f32 %v1309, 0.0
  %v1346 = vmax.f32 %v1310, 0.0
  %v1347 = vmax.f32 %v1311, 0.0
  %v1348 = vmax.f32 %v1312, 0.0
  %v1349 = vmax.f32 %v1313, 0.0
  %1350 = vst [vmem:[%s6] sm:$0xff] %v1314
  %1351 = vst [vmem:[%s6 + $0x8] sm:$0xff] %v1315
  %1352 = vst [vmem:[%s6 + $0x10] sm:$0xff] %v1316
  %1353 = vst [vmem:[%s6 + $0x18] sm:$0xff] %v1317
  %1354 = vst [vmem:[%s6 + $0x20] sm:$0xff] %v1318
  %1355 = vst [vmem:[%s6 + $0x28] sm:$0xff] %v1319
  %1356 = vst [vmem:[%s6 + $0x30] sm:$0xff] %v1320
  %1357 = vst [vmem:[%s6 + $0x38] sm:$0xff] %v1321
  %1358 = vst [vmem:[%s6 + $0x40] sm:$0xff] %v1322
  %1359 = vst [vmem:[%s6 + $0x48] sm:$0xff] %v1323
  %1360 = vst [vmem:[%s6 + $0x50] sm:$0xff] %v1324
  %1361 = vst [vmem:[%s6 + $0x58] sm:$0xff] %v1325
  %1362 = vst [vmem:[%s6 + $0x60] sm:$0xff] %v1326
  %1363 = vst [vmem:[%s6 + $0x68] sm:$0xff] %v1327
  %1364 = vst [vmem:[%s6 + $0x70] sm:$0xff] %v1328
  %1365 = vst [vmem:[%s6 + $0x78] sm:$0xff] %v1329
  %1366 = vst [vmem:[%s6 + $0x80] sm:$0xff] %v1330
  %1367 = vst [vmem:[%s6 + $0x88] sm:$0xff] %v1331
  %1368 = vst [vmem:[%s6 + $0x90] sm:$0xff] %v1332
  %1369 = vst [vmem:[%s6 + $0x98] sm:$0xff] %v1333
  %1370 = vst [vmem:[%s6 + $0xa0] sm:$0xff] %v1334
  %1371 = vst [vmem:[%s6 + $0xa8] sm:$0xff] %v1335
  %1372 = vst [vmem:[%s6 + $0xb0] sm:$0xff] %v1336
  %1373 = vst [vmem:[%s6 + $0xb8] sm:$0xff] %v1337
  %1374 = vst [vmem:[%s6 + $0xc0] sm:$0xff] %v1338
  %1375 = vst [vmem:[%s6 + $0xc8] sm:$0xff] %v1339
  %1376 = vst [vmem:[%s6 + $0xd0] sm:$0xff] %v1340
  %1377 = vst [vmem:[%s6 + $0xd8] sm:$0xff] %v1341
  %1378 = vst [vmem:[%s6 + $0xe0] sm:$0xff] %v1342
  %1379 = vst [vmem:[%s6 + $0xe8] sm:$0xff] %v1343
  %1380 = vst [vmem:[%s6 + $0xf0] sm:$0xff] %v1344
  %1381 = vst [vmem:[%s6 + $0xf8] sm:$0xff] %v1345
  %1382 = vst [vmem:[%s6 + $0x100] sm:$0xff] %v1346
  %1383 = vst [vmem:[%s6 + $0x108] sm:$0xff] %v1347
  %1384 = vst [vmem:[%s6 + $0x110] sm:$0xff] %v1348
  %1385 = vst [vmem:[%s6 + $0x118] sm:$0xff] %v1349
  // Predicated region
  $region26: #{cnn_forward.3} parent=0 // pred_check
    _
  $region27: #{cnn_forward.3} parent=0 // pred_check_branch
    %1387 = sbr.rel (0) target = $region29
  $region28: #{cnn_forward.3} parent=0 // pred_region
    _
  $region29: #{cnn_forward.3} parent=0 // pred_fallthru
    _
  // Predicated region
  $region30: #{cnn_forward.3} parent=0 // pred_check
    _
  $region31: #{cnn_forward.3} parent=0 // pred_check_branch
    %1389 = sbr.rel (0) target = $region33
  $region32: #{cnn_forward.3} parent=0 // pred_region
    _
  $region33: #{cnn_forward.3} parent=0 // pred_fallthru
    _

// kernel: cnn_forward.5
$region0: #{cnn_forward.5}
  #allocation0 [shape = 'u32[]', space=smem, size = 0x4, offset = 0x4, fixed_abs, tag = 'smem constant byte address 0x4 - core index']
  #allocation1 [shape = 'u32[144,128]{1,0:T(1,128)}', space=vmem, size = 0x12000, scoped, tag = 'internal scratch']
  %s0 = inlined_call_operand.vmem [shape: f32[8,512], index: 0, kind: input, shape index: {}]
  %s1 = inlined_call_operand.vmem [shape: f32[512,128], index: 1, kind: input, shape index: {}]
  %s2 = inlined_call_operand.vmem [shape: f32[1,128], index: 2, kind: input, shape index: {}]
  %s3 = inlined_call_operand.vmem [shape: f32[8,128], index: 3, kind: output, shape index: {}]
  %s4 = sld [smem:[#allocation0]]
  $region22: #{cnn_forward.5} parent=0
    _
  %s6 = ssub.s32 1, %s4
  %s7 = scalar_select 0, %s6, %s4
  // Predicated region
  $region2: #{cnn_forward.5} parent=0 // pred_check
    _
  $region3: #{cnn_forward.5} parent=0 // pred_check_branch
    %9 = sbr.rel (0) target = $region5
  $region4: #{cnn_forward.5} parent=0 // pred_region
    _
  $region5: #{cnn_forward.5} parent=0 // pred_fallthru
    _
  // Predicated region
  $region6: #{cnn_forward.5} parent=0 // pred_check
    _
  $region7: #{cnn_forward.5} parent=0 // pred_check_branch
    %11 = sbr.rel (0) target = $region9
  $region8: #{cnn_forward.5} parent=0 // pred_region
    _
  $region9: #{cnn_forward.5} parent=0 // pred_fallthru
    _
  // Predicated region
  $region10: #{cnn_forward.5} parent=0 // pred_check
    _
  $region11: #{cnn_forward.5} parent=0 // pred_check_branch
    %13 = sbr.rel (0) target = $region13
  $region12: #{cnn_forward.5} parent=0 // pred_region
    _
  $region13: #{cnn_forward.5} parent=0 // pred_fallthru
    _
  %v14 = vld [vmem:[%s0] sm:$0xff]
  %v15 = vld [vmem:[%s0 + $0x8] sm:$0xff]
  %v16 = vld [vmem:[%s0 + $0x10] sm:$0xff]
  %v17 = vld [vmem:[%s0 + $0x18] sm:$0xff]
  %v18 = vld [vmem:[%s1] sm:$0xff]
  %v19 = vld [vmem:[%s1 + $0x8] sm:$0xff]
  %v20 = vld [vmem:[%s1 + $0x10] sm:$0xff]
  %v21 = vld [vmem:[%s1 + $0x18] sm:$0xff]
  %v22 = vld [vmem:[%s1 + $0x20] sm:$0xff]
  %v23 = vld [vmem:[%s1 + $0x28] sm:$0xff]
  %v24 = vld [vmem:[%s1 + $0x30] sm:$0xff]
  %v25 = vld [vmem:[%s1 + $0x38] sm:$0xff]
  %v26 = vld [vmem:[%s1 + $0x40] sm:$0xff]
  %v27 = vld [vmem:[%s1 + $0x48] sm:$0xff]
  %v28 = vld [vmem:[%s1 + $0x50] sm:$0xff]
  %v29 = vld [vmem:[%s1 + $0x58] sm:$0xff]
  %v30 = vld [vmem:[%s1 + $0x60] sm:$0xff]
  %v31 = vld [vmem:[%s1 + $0x68] sm:$0xff]
  %v32 = vld [vmem:[%s1 + $0x70] sm:$0xff]
  %v33 = vld [vmem:[%s1 + $0x78] sm:$0xff]
  %v34 = vld [vmem:[%s1 + $0x80] sm:$0xff]
  %v35 = vld [vmem:[%s1 + $0x88] sm:$0xff]
  %v36 = vld [vmem:[%s1 + $0x90] sm:$0xff]
  %v37 = vld [vmem:[%s1 + $0x98] sm:$0xff]
  %v38 = vld [vmem:[%s1 + $0xa0] sm:$0xff]
  %v39 = vld [vmem:[%s1 + $0xa8] sm:$0xff]
  %v40 = vld [vmem:[%s1 + $0xb0] sm:$0xff]
  %v41 = vld [vmem:[%s1 + $0xb8] sm:$0xff]
  %v42 = vld [vmem:[%s1 + $0xc0] sm:$0xff]
  %v43 = vld [vmem:[%s1 + $0xc8] sm:$0xff]
  %v44 = vld [vmem:[%s1 + $0xd0] sm:$0xff]
  %v45 = vld [vmem:[%s1 + $0xd8] sm:$0xff]
  %v46 = vld [vmem:[%s1 + $0xe0] sm:$0xff]
  %v47 = vld [vmem:[%s1 + $0xe8] sm:$0xff]
  %v48 = vld [vmem:[%s1 + $0xf0] sm:$0xff]
  %v49 = vld [vmem:[%s1 + $0xf8] sm:$0xff]
  %v50 = vld [vmem:[%s1 + $0x100] sm:$0xff]
  %v51 = vld [vmem:[%s1 + $0x108] sm:$0xff]
  %v52 = vld [vmem:[%s1 + $0x110] sm:$0xff]
  %v53 = vld [vmem:[%s1 + $0x118] sm:$0xff]
  %v54 = vld [vmem:[%s1 + $0x120] sm:$0xff]
  %v55 = vld [vmem:[%s1 + $0x128] sm:$0xff]
  %v56 = vld [vmem:[%s1 + $0x130] sm:$0xff]
  %v57 = vld [vmem:[%s1 + $0x138] sm:$0xff]
  %v58 = vld [vmem:[%s1 + $0x140] sm:$0xff]
  %v59 = vld [vmem:[%s1 + $0x148] sm:$0xff]
  %v60 = vld [vmem:[%s1 + $0x150] sm:$0xff]
  %v61 = vld [vmem:[%s1 + $0x158] sm:$0xff]
  %v62 = vld [vmem:[%s1 + $0x160] sm:$0xff]
  %v63 = vld [vmem:[%s1 + $0x168] sm:$0xff]
  %v64 = vld [vmem:[%s1 + $0x170] sm:$0xff]
  %v65 = vld [vmem:[%s1 + $0x178] sm:$0xff]
  %v66 = vld [vmem:[%s1 + $0x180] sm:$0xff]
  %v67 = vld [vmem:[%s1 + $0x188] sm:$0xff]
  %v68 = vld [vmem:[%s1 + $0x190] sm:$0xff]
  %v69 = vld [vmem:[%s1 + $0x198] sm:$0xff]
  %v70 = vld [vmem:[%s1 + $0x1a0] sm:$0xff]
  %v71 = vld [vmem:[%s1 + $0x1a8] sm:$0xff]
  %v72 = vld [vmem:[%s1 + $0x1b0] sm:$0xff]
  %v73 = vld [vmem:[%s1 + $0x1b8] sm:$0xff]
  %v74 = vld [vmem:[%s1 + $0x1c0] sm:$0xff]
  %v75 = vld [vmem:[%s1 + $0x1c8] sm:$0xff]
  %v76 = vld [vmem:[%s1 + $0x1d0] sm:$0xff]
  %v77 = vld [vmem:[%s1 + $0x1d8] sm:$0xff]
  %v78 = vld [vmem:[%s1 + $0x1e0] sm:$0xff]
  %v79 = vld [vmem:[%s1 + $0x1e8] sm:$0xff]
  %v80 = vld [vmem:[%s1 + $0x1f0] sm:$0xff]
  %v81 = vld [vmem:[%s1 + $0x1f8] sm:$0xff]
  %v82 = vld [vmem:[%s2] sm:$0x1]
  %v84 = vlaneseq
  %v85 = vshrl.u32 %v84, 7
  %v86 = vsub.s32 0, %v85
  %v87 = vrot.slane %v82, %v86
  %89 = vmatprep.subr.mxu0 0.0
  %90 = vmatpush1.msra.mxu0 %v18
  %91 = vmatprep.subr.mxu0 0.0
  %92 = vmatpush1.msra.mxu0 %v19
  %93 = vmatprep.subr.mxu0 0.0
  %94 = vmatpush1.msra.mxu0 %v20
  %95 = vmatprep.subr.mxu0 0.0
  %96 = vmatpush1.msra.mxu0 %v21
  %97 = vmatprep.subr.mxu0 0.0
  %98 = vmatpush1.msra.mxu0 %v22
  %99 = vmatprep.subr.mxu0 0.0
  %100 = vmatpush1.msra.mxu0 %v23
  %101 = vmatprep.subr.mxu0 0.0
  %102 = vmatpush1.msra.mxu0 %v24
  %103 = vmatprep.subr.mxu0 0.0
  %104 = vmatpush1.msra.mxu0 %v25
  %105 = vmatprep.subr.mxu0 0.0
  %106 = vmatpush1.msra.mxu0 %v26
  %107 = vmatprep.subr.mxu0 0.0
  %108 = vmatpush1.msra.mxu0 %v27
  %109 = vmatprep.subr.mxu0 0.0
  %110 = vmatpush1.msra.mxu0 %v28
  %111 = vmatprep.subr.mxu0 0.0
  %112 = vmatpush1.msra.mxu0 %v29
  %113 = vmatprep.subr.mxu0 0.0
  %114 = vmatpush1.msra.mxu0 %v30
  %115 = vmatprep.subr.mxu0 0.0
  %116 = vmatpush1.msra.mxu0 %v31
  %117 = vmatprep.subr.mxu0 0.0
  %118 = vmatpush1.msra.mxu0 %v32
  %119 = vmatprep.subr.mxu0 0.0
  %120 = vmatpush1.msra.mxu0 %v33
  %121 = vmatprep.subr.mxu0 0.0
  %122 = vmatpush1.msra.mxu0 %v34
  %123 = vmatprep.subr.mxu0 0.0
  %124 = vmatpush1.msra.mxu0 %v35
  %125 = vmatprep.subr.mxu0 0.0
  %126 = vmatpush1.msra.mxu0 %v36
  %127 = vmatprep.subr.mxu0 0.0
  %128 = vmatpush1.msra.mxu0 %v37
  %129 = vmatprep.subr.mxu0 0.0
  %130 = vmatpush1.msra.mxu0 %v38
  %131 = vmatprep.subr.mxu0 0.0
  %132 = vmatpush1.msra.mxu0 %v39
  %133 = vmatprep.subr.mxu0 0.0
  %134 = vmatpush1.msra.mxu0 %v40
  %135 = vmatprep.subr.mxu0 0.0
  %136 = vmatpush1.msra.mxu0 %v41
  %137 = vmatprep.subr.mxu0 0.0
  %138 = vmatpush1.msra.mxu0 %v42
  %139 = vmatprep.subr.mxu0 0.0
  %140 = vmatpush1.msra.mxu0 %v43
  %141 = vmatprep.subr.mxu0 0.0
  %142 = vmatpush1.msra.mxu0 %v44
  %143 = vmatprep.subr.mxu0 0.0
  %144 = vmatpush1.msra.mxu0 %v45
  %145 = vmatprep.subr.mxu0 0.0
  %146 = vmatpush1.msra.mxu0 %v46
  %147 = vmatprep.subr.mxu0 0.0
  %148 = vmatpush1.msra.mxu0 %v47
  %149 = vmatprep.subr.mxu0 0.0
  %150 = vmatpush1.msra.mxu0 %v48
  %151 = vmatprep.subr.mxu0 0.0
  %152 = vmatpush1.msra.mxu0 %v49
  %153 = vmatprep.mubr.f32.mxu0 %v15
  %154 = vmatmul.mubr.f32.gmra.mrb[0].mxu0 %v14
  %v155 = vpop.f32.mrb[0].mxu0
  %v156 = vadd.f32 %v87, %v155
  %v157 = vpop.f32.mrb[0].mxu0
  %158 = vdwg.mxu0
  %159 = vmatprep.subr.mxu0 0.0
  %160 = vmatpush1.msra.mxu0 %v50
  %161 = vmatprep.subr.mxu0 0.0
  %162 = vmatpush1.msra.mxu0 %v51
  %163 = vmatprep.subr.mxu0 0.0
  %164 = vmatpush1.msra.mxu0 %v52
  %165 = vmatprep.subr.mxu0 0.0
  %166 = vmatpush1.msra.mxu0 %v53
  %167 = vmatprep.subr.mxu0 0.0
  %168 = vmatpush1.msra.mxu0 %v54
  %169 = vmatprep.subr.mxu0 0.0
  %170 = vmatpush1.msra.mxu0 %v55
  %171 = vmatprep.subr.mxu0 0.0
  %172 = vmatpush1.msra.mxu0 %v56
  %173 = vmatprep.subr.mxu0 0.0
  %174 = vmatpush1.msra.mxu0 %v57
  %175 = vmatprep.subr.mxu0 0.0
  %176 = vmatpush1.msra.mxu0 %v58
  %177 = vmatprep.subr.mxu0 0.0
  %178 = vmatpush1.msra.mxu0 %v59
  %179 = vmatprep.subr.mxu0 0.0
  %180 = vmatpush1.msra.mxu0 %v60
  %181 = vmatprep.subr.mxu0 0.0
  %182 = vmatpush1.msra.mxu0 %v61
  %183 = vmatprep.subr.mxu0 0.0
  %184 = vmatpush1.msra.mxu0 %v62
  %185 = vmatprep.subr.mxu0 0.0
  %186 = vmatpush1.msra.mxu0 %v63
  %187 = vmatprep.subr.mxu0 0.0
  %188 = vmatpush1.msra.mxu0 %v64
  %189 = vmatprep.subr.mxu0 0.0
  %190 = vmatpush1.msra.mxu0 %v65
  %191 = vmatprep.subr.mxu0 0.0
  %192 = vmatpush1.msra.mxu0 %v66
  %193 = vmatprep.subr.mxu0 0.0
  %194 = vmatpush1.msra.mxu0 %v67
  %195 = vmatprep.subr.mxu0 0.0
  %196 = vmatpush1.msra.mxu0 %v68
  %197 = vmatprep.subr.mxu0 0.0
  %198 = vmatpush1.msra.mxu0 %v69
  %199 = vmatprep.subr.mxu0 0.0
  %200 = vmatpush1.msra.mxu0 %v70
  %201 = vmatprep.subr.mxu0 0.0
  %202 = vmatpush1.msra.mxu0 %v71
  %203 = vmatprep.subr.mxu0 0.0
  %204 = vmatpush1.msra.mxu0 %v72
  %205 = vmatprep.subr.mxu0 0.0
  %206 = vmatpush1.msra.mxu0 %v73
  %207 = vmatprep.subr.mxu0 0.0
  %208 = vmatpush1.msra.mxu0 %v74
  %209 = vmatprep.subr.mxu0 0.0
  %210 = vmatpush1.msra.mxu0 %v75
  %211 = vmatprep.subr.mxu0 0.0
  %212 = vmatpush1.msra.mxu0 %v76
  %213 = vmatprep.subr.mxu0 0.0
  %214 = vmatpush1.msra.mxu0 %v77
  %215 = vmatprep.subr.mxu0 0.0
  %216 = vmatpush1.msra.mxu0 %v78
  %217 = vmatprep.subr.mxu0 0.0
  %218 = vmatpush1.msra.mxu0 %v79
  %219 = vmatprep.subr.mxu0 0.0
  %220 = vmatpush1.msra.mxu0 %v80
  %221 = vmatprep.subr.mxu0 0.0
  %222 = vmatpush1.msra.mxu0 %v81
  %223 = vmatprep.mubr.f32.mxu0 %v17
  %224 = vmatmul.mubr.f32.gmra.mrb[0].mxu0 %v16
  %v225 = vpop.f32.mrb[0].mxu0
  %v226 = vadd.f32 %v156, %v225
  %v227 = vpop.f32.mrb[0].mxu0
  %228 = vdwg.mxu0
  %229 = vst [vmem:[%s3] sm:$0xff] %v226
  // Predicated region
  $region14: #{cnn_forward.5} parent=0 // pred_check
    _
  $region15: #{cnn_forward.5} parent=0 // pred_check_branch
    %231 = sbr.rel (0) target = $region17
  $region16: #{cnn_forward.5} parent=0 // pred_region
    _
  $region17: #{cnn_forward.5} parent=0 // pred_fallthru
    _
  // Predicated region
  $region18: #{cnn_forward.5} parent=0 // pred_check
    _
  $region19: #{cnn_forward.5} parent=0 // pred_check_branch
    %233 = sbr.rel (0) target = $region21
  $region20: #{cnn_forward.5} parent=0 // pred_region
    _
  $region21: #{cnn_forward.5} parent=0 // pred_fallthru
    _

// kernel: cnn_forward.4
$region0: #{cnn_forward.4}
  #allocation0 [shape = 'u32[]', space=smem, size = 0x4, offset = 0x4, fixed_abs, tag = 'smem constant byte address 0x4 - core index']
  #allocation1 [shape = 'u32[144,128]{1,0:T(1,128)}', space=vmem, size = 0x12000, scoped, tag = 'internal scratch']
  %s0 = inlined_call_operand.vmem [shape: f32[32,512], index: 0, kind: input, shape index: {}]
  %s1 = inlined_call_operand.vmem [shape: f32[32,512], index: 1, kind: input, shape index: {}]
  %s2 = inlined_call_operand.vmem [shape: f32[32,512], index: 2, kind: input, shape index: {}]
  %s3 = inlined_call_operand.vmem [shape: f32[32,512], index: 3, kind: input, shape index: {}]
  %s4 = inlined_call_operand.vmem [shape: f32[512,128], index: 4, kind: input, shape index: {}]
  %s5 = inlined_call_operand.vmem [shape: f32[1,128], index: 5, kind: input, shape index: {}]
  %s6 = inlined_call_operand.vmem [shape: f32[32,128], index: 6, kind: output, shape index: {}]
  %s7 = sld [smem:[#allocation0]]
  $region34: #{cnn_forward.4} parent=0
    _
  %s9 = ssub.s32 1, %s7
  %s10 = scalar_select 0, %s9, %s7
  // Predicated region
  $region2: #{cnn_forward.4} parent=0 // pred_check
    _
  $region3: #{cnn_forward.4} parent=0 // pred_check_branch
    %12 = sbr.rel (0) target = $region5
  $region4: #{cnn_forward.4} parent=0 // pred_region
    _
  $region5: #{cnn_forward.4} parent=0 // pred_fallthru
    _
  // Predicated region
  $region6: #{cnn_forward.4} parent=0 // pred_check
    _
  $region7: #{cnn_forward.4} parent=0 // pred_check_branch
    %14 = sbr.rel (0) target = $region9
  $region8: #{cnn_forward.4} parent=0 // pred_region
    _
  $region9: #{cnn_forward.4} parent=0 // pred_fallthru
    _
  // Predicated region
  $region10: #{cnn_forward.4} parent=0 // pred_check
    _
  $region11: #{cnn_forward.4} parent=0 // pred_check_branch
    %16 = sbr.rel (0) target = $region13
  $region12: #{cnn_forward.4} parent=0 // pred_region
    _
  $region13: #{cnn_forward.4} parent=0 // pred_fallthru
    _
  // Predicated region
  $region14: #{cnn_forward.4} parent=0 // pred_check
    _
  $region15: #{cnn_forward.4} parent=0 // pred_check_branch
    %18 = sbr.rel (0) target = $region17
  $region16: #{cnn_forward.4} parent=0 // pred_region
    _
  $region17: #{cnn_forward.4} parent=0 // pred_fallthru
    _
  // Predicated region
  $region18: #{cnn_forward.4} parent=0 // pred_check
    _
  $region19: #{cnn_forward.4} parent=0 // pred_check_branch
    %20 = sbr.rel (0) target = $region21
  $region20: #{cnn_forward.4} parent=0 // pred_region
    _
  $region21: #{cnn_forward.4} parent=0 // pred_fallthru
    _
  // Predicated region
  $region22: #{cnn_forward.4} parent=0 // pred_check
    _
  $region23: #{cnn_forward.4} parent=0 // pred_check_branch
    %22 = sbr.rel (0) target = $region25
  $region24: #{cnn_forward.4} parent=0 // pred_region
    _
  $region25: #{cnn_forward.4} parent=0 // pred_fallthru
    _
  %v23 = vld [vmem:[%s4] sm:$0xff]
  %v24 = vld [vmem:[%s4 + $0x8] sm:$0xff]
  %v25 = vld [vmem:[%s4 + $0x10] sm:$0xff]
  %v26 = vld [vmem:[%s4 + $0x18] sm:$0xff]
  %v27 = vld [vmem:[%s4 + $0x20] sm:$0xff]
  %v28 = vld [vmem:[%s4 + $0x28] sm:$0xff]
  %v29 = vld [vmem:[%s4 + $0x30] sm:$0xff]
  %v30 = vld [vmem:[%s4 + $0x38] sm:$0xff]
  %v31 = vld [vmem:[%s4 + $0x40] sm:$0xff]
  %v32 = vld [vmem:[%s4 + $0x48] sm:$0xff]
  %v33 = vld [vmem:[%s4 + $0x50] sm:$0xff]
  %v34 = vld [vmem:[%s4 + $0x58] sm:$0xff]
  %v35 = vld [vmem:[%s4 + $0x60] sm:$0xff]
  %v36 = vld [vmem:[%s4 + $0x68] sm:$0xff]
  %v37 = vld [vmem:[%s4 + $0x70] sm:$0xff]
  %v38 = vld [vmem:[%s4 + $0x78] sm:$0xff]
  %v39 = vld [vmem:[%s4 + $0x80] sm:$0xff]
  %v40 = vld [vmem:[%s4 + $0x88] sm:$0xff]
  %v41 = vld [vmem:[%s4 + $0x90] sm:$0xff]
  %v42 = vld [vmem:[%s4 + $0x98] sm:$0xff]
  %v43 = vld [vmem:[%s4 + $0xa0] sm:$0xff]
  %v44 = vld [vmem:[%s4 + $0xa8] sm:$0xff]
  %v45 = vld [vmem:[%s4 + $0xb0] sm:$0xff]
  %v46 = vld [vmem:[%s4 + $0xb8] sm:$0xff]
  %v47 = vld [vmem:[%s4 + $0xc0] sm:$0xff]
  %v48 = vld [vmem:[%s4 + $0xc8] sm:$0xff]
  %v49 = vld [vmem:[%s4 + $0xd0] sm:$0xff]
  %v50 = vld [vmem:[%s4 + $0xd8] sm:$0xff]
  %v51 = vld [vmem:[%s4 + $0xe0] sm:$0xff]
  %v52 = vld [vmem:[%s4 + $0xe8] sm:$0xff]
  %v53 = vld [vmem:[%s4 + $0xf0] sm:$0xff]
  %v54 = vld [vmem:[%s4 + $0xf8] sm:$0xff]
  %v55 = vld [vmem:[%s4 + $0x100] sm:$0xff]
  %v56 = vld [vmem:[%s4 + $0x108] sm:$0xff]
  %v57 = vld [vmem:[%s4 + $0x110] sm:$0xff]
  %v58 = vld [vmem:[%s4 + $0x118] sm:$0xff]
  %v59 = vld [vmem:[%s4 + $0x120] sm:$0xff]
  %v60 = vld [vmem:[%s4 + $0x128] sm:$0xff]
  %v61 = vld [vmem:[%s4 + $0x130] sm:$0xff]
  %v62 = vld [vmem:[%s4 + $0x138] sm:$0xff]
  %v63 = vld [vmem:[%s4 + $0x140] sm:$0xff]
  %v64 = vld [vmem:[%s4 + $0x148] sm:$0xff]
  %v65 = vld [vmem:[%s4 + $0x150] sm:$0xff]
  %v66 = vld [vmem:[%s4 + $0x158] sm:$0xff]
  %v67 = vld [vmem:[%s4 + $0x160] sm:$0xff]
  %v68 = vld [vmem:[%s4 + $0x168] sm:$0xff]
  %v69 = vld [vmem:[%s4 + $0x170] sm:$0xff]
  %v70 = vld [vmem:[%s4 + $0x178] sm:$0xff]
  %v71 = vld [vmem:[%s4 + $0x180] sm:$0xff]
  %v72 = vld [vmem:[%s4 + $0x188] sm:$0xff]
  %v73 = vld [vmem:[%s4 + $0x190] sm:$0xff]
  %v74 = vld [vmem:[%s4 + $0x198] sm:$0xff]
  %v75 = vld [vmem:[%s4 + $0x1a0] sm:$0xff]
  %v76 = vld [vmem:[%s4 + $0x1a8] sm:$0xff]
  %v77 = vld [vmem:[%s4 + $0x1b0] sm:$0xff]
  %v78 = vld [vmem:[%s4 + $0x1b8] sm:$0xff]
  %v79 = vld [vmem:[%s4 + $0x1c0] sm:$0xff]
  %v80 = vld [vmem:[%s4 + $0x1c8] sm:$0xff]
  %v81 = vld [vmem:[%s4 + $0x1d0] sm:$0xff]
  %v82 = vld [vmem:[%s4 + $0x1d8] sm:$0xff]
  %v83 = vld [vmem:[%s4 + $0x1e0] sm:$0xff]
  %v84 = vld [vmem:[%s4 + $0x1e8] sm:$0xff]
  %v85 = vld [vmem:[%s4 + $0x1f0] sm:$0xff]
  %v86 = vld [vmem:[%s4 + $0x1f8] sm:$0xff]
  %v87 = vld [vmem:[%s0] sm:$0xff]
  %v88 = vld [vmem:[%s0 + $0x8] sm:$0xff]
  %v89 = vld [vmem:[%s0 + $0x10] sm:$0xff]
  %v90 = vld [vmem:[%s0 + $0x18] sm:$0xff]
  %v91 = vld [vmem:[%s0 + $0x20] sm:$0xff]
  %v92 = vld [vmem:[%s0 + $0x28] sm:$0xff]
  %v93 = vld [vmem:[%s0 + $0x30] sm:$0xff]
  %v94 = vld [vmem:[%s0 + $0x38] sm:$0xff]
  %v95 = vld [vmem:[%s0 + $0x40] sm:$0xff]
  %v96 = vld [vmem:[%s0 + $0x48] sm:$0xff]
  %v97 = vld [vmem:[%s0 + $0x50] sm:$0xff]
  %v98 = vld [vmem:[%s0 + $0x58] sm:$0xff]
  %v99 = vld [vmem:[%s0 + $0x60] sm:$0xff]
  %v100 = vld [vmem:[%s0 + $0x68] sm:$0xff]
  %v101 = vld [vmem:[%s0 + $0x70] sm:$0xff]
  %v102 = vld [vmem:[%s0 + $0x78] sm:$0xff]
  %103 = vmatprep.subr.mxu0 0.0
  %104 = vmatpush1.msra.mxu0 %v23
  %105 = vmatprep.subr.mxu0 0.0
  %106 = vmatpush1.msra.mxu0 %v24
  %107 = vmatprep.subr.mxu0 0.0
  %108 = vmatpush1.msra.mxu0 %v25
  %109 = vmatprep.subr.mxu0 0.0
  %110 = vmatpush1.msra.mxu0 %v26
  %111 = vmatprep.subr.mxu0 0.0
  %112 = vmatpush1.msra.mxu0 %v27
  %113 = vmatprep.subr.mxu0 0.0
  %114 = vmatpush1.msra.mxu0 %v28
  %115 = vmatprep.subr.mxu0 0.0
  %116 = vmatpush1.msra.mxu0 %v29
  %117 = vmatprep.subr.mxu0 0.0
  %118 = vmatpush1.msra.mxu0 %v30
  %119 = vmatprep.subr.mxu0 0.0
  %120 = vmatpush1.msra.mxu0 %v31
  %121 = vmatprep.subr.mxu0 0.0
  %122 = vmatpush1.msra.mxu0 %v32
  %123 = vmatprep.subr.mxu0 0.0
  %124 = vmatpush1.msra.mxu0 %v33
  %125 = vmatprep.subr.mxu0 0.0
  %126 = vmatpush1.msra.mxu0 %v34
  %127 = vmatprep.subr.mxu0 0.0
  %128 = vmatpush1.msra.mxu0 %v35
  %129 = vmatprep.subr.mxu0 0.0
  %130 = vmatpush1.msra.mxu0 %v36
  %131 = vmatprep.subr.mxu0 0.0
  %132 = vmatpush1.msra.mxu0 %v37
  %133 = vmatprep.subr.mxu0 0.0
  %134 = vmatpush1.msra.mxu0 %v38
  %135 = vmatprep.subr.mxu0 0.0
  %136 = vmatpush1.msra.mxu0 %v39
  %137 = vmatprep.subr.mxu0 0.0
  %138 = vmatpush1.msra.mxu0 %v40
  %139 = vmatprep.subr.mxu0 0.0
  %140 = vmatpush1.msra.mxu0 %v41
  %141 = vmatprep.subr.mxu0 0.0
  %142 = vmatpush1.msra.mxu0 %v42
  %143 = vmatprep.subr.mxu0 0.0
  %144 = vmatpush1.msra.mxu0 %v43
  %145 = vmatprep.subr.mxu0 0.0
  %146 = vmatpush1.msra.mxu0 %v44
  %147 = vmatprep.subr.mxu0 0.0
  %148 = vmatpush1.msra.mxu0 %v45
  %149 = vmatprep.subr.mxu0 0.0
  %150 = vmatpush1.msra.mxu0 %v46
  %151 = vmatprep.subr.mxu0 0.0
  %152 = vmatpush1.msra.mxu0 %v47
  %153 = vmatprep.subr.mxu0 0.0
  %154 = vmatpush1.msra.mxu0 %v48
  %155 = vmatprep.subr.mxu0 0.0
  %156 = vmatpush1.msra.mxu0 %v49
  %157 = vmatprep.subr.mxu0 0.0
  %158 = vmatpush1.msra.mxu0 %v50
  %159 = vmatprep.subr.mxu0 0.0
  %160 = vmatpush1.msra.mxu0 %v51
  %161 = vmatprep.subr.mxu0 0.0
  %162 = vmatpush1.msra.mxu0 %v52
  %163 = vmatprep.subr.mxu0 0.0
  %164 = vmatpush1.msra.mxu0 %v53
  %165 = vmatprep.subr.mxu0 0.0
  %166 = vmatpush1.msra.mxu0 %v54
  %167 = vmatprep.mubr.f32.mxu0 %v88
  %168 = vmatmul.mubr.f32.gmra.mrb[0].mxu0 %v87
  %v169 = vpop.f32.mrb[0].mxu0
  %v170 = vadd.f32 0.0, %v169
  %v171 = vpop.f32.mrb[0].mxu0
  %172 = vmatprep.mubr.f32.mxu0 %v92
  %173 = vmatmul.mubr.f32.gmra.mrb[0].mxu0 %v91
  %v174 = vpop.f32.mrb[0].mxu0
  %v175 = vadd.f32 0.0, %v174
  %v176 = vpop.f32.mrb[0].mxu0
  %177 = vmatprep.mubr.f32.mxu0 %v96
  %178 = vmatmul.mubr.f32.gmra.mrb[0].mxu0 %v95
  %v179 = vpop.f32.mrb[0].mxu0
  %v180 = vadd.f32 0.0, %v179
  %v181 = vpop.f32.mrb[0].mxu0
  %182 = vmatprep.mubr.f32.mxu0 %v100
  %183 = vmatmul.mubr.f32.gmra.mrb[0].mxu0 %v99
  %v184 = vpop.f32.mrb[0].mxu0
  %v185 = vadd.f32 0.0, %v184
  %v186 = vpop.f32.mrb[0].mxu0
  %187 = vdwg.mxu0
  %188 = vmatprep.subr.mxu0 0.0
  %189 = vmatpush1.msra.mxu0 %v55
  %190 = vmatprep.subr.mxu0 0.0
  %191 = vmatpush1.msra.mxu0 %v56
  %192 = vmatprep.subr.mxu0 0.0
  %193 = vmatpush1.msra.mxu0 %v57
  %194 = vmatprep.subr.mxu0 0.0
  %195 = vmatpush1.msra.mxu0 %v58
  %196 = vmatprep.subr.mxu0 0.0
  %197 = vmatpush1.msra.mxu0 %v59
  %198 = vmatprep.subr.mxu0 0.0
  %199 = vmatpush1.msra.mxu0 %v60
  %200 = vmatprep.subr.mxu0 0.0
  %201 = vmatpush1.msra.mxu0 %v61
  %202 = vmatprep.subr.mxu0 0.0
  %203 = vmatpush1.msra.mxu0 %v62
  %204 = vmatprep.subr.mxu0 0.0
  %205 = vmatpush1.msra.mxu0 %v63
  %206 = vmatprep.subr.mxu0 0.0
  %207 = vmatpush1.msra.mxu0 %v64
  %208 = vmatprep.subr.mxu0 0.0
  %209 = vmatpush1.msra.mxu0 %v65
  %210 = vmatprep.subr.mxu0 0.0
  %211 = vmatpush1.msra.mxu0 %v66
  %212 = vmatprep.subr.mxu0 0.0
  %213 = vmatpush1.msra.mxu0 %v67
  %214 = vmatprep.subr.mxu0 0.0
  %215 = vmatpush1.msra.mxu0 %v68
  %216 = vmatprep.subr.mxu0 0.0
  %217 = vmatpush1.msra.mxu0 %v69
  %218 = vmatprep.subr.mxu0 0.0
  %219 = vmatpush1.msra.mxu0 %v70
  %220 = vmatprep.subr.mxu0 0.0
  %221 = vmatpush1.msra.mxu0 %v71
  %222 = vmatprep.subr.mxu0 0.0
  %223 = vmatpush1.msra.mxu0 %v72
  %224 = vmatprep.subr.mxu0 0.0
  %225 = vmatpush1.msra.mxu0 %v73
  %226 = vmatprep.subr.mxu0 0.0
  %227 = vmatpush1.msra.mxu0 %v74
  %228 = vmatprep.subr.mxu0 0.0
  %229 = vmatpush1.msra.mxu0 %v75
  %230 = vmatprep.subr.mxu0 0.0
  %231 = vmatpush1.msra.mxu0 %v76
  %232 = vmatprep.subr.mxu0 0.0
  %233 = vmatpush1.msra.mxu0 %v77
  %234 = vmatprep.subr.mxu0 0.0
  %235 = vmatpush1.msra.mxu0 %v78
  %236 = vmatprep.subr.mxu0 0.0
  %237 = vmatpush1.msra.mxu0 %v79
  %238 = vmatprep.subr.mxu0 0.0
  %239 = vmatpush1.msra.mxu0 %v80
  %240 = vmatprep.subr.mxu0 0.0
  %241 = vmatpush1.msra.mxu0 %v81
  %242 = vmatprep.subr.mxu0 0.0
  %243 = vmatpush1.msra.mxu0 %v82
  %244 = vmatprep.subr.mxu0 0.0
  %245 = vmatpush1.msra.mxu0 %v83
  %246 = vmatprep.subr.mxu0 0.0
  %247 = vmatpush1.msra.mxu0 %v84
  %248 = vmatprep.subr.mxu0 0.0
  %249 = vmatpush1.msra.mxu0 %v85
  %250 = vmatprep.subr.mxu0 0.0
  %251 = vmatpush1.msra.mxu0 %v86
  %252 = vmatprep.mubr.f32.mxu0 %v90
  %253 = vmatmul.mubr.f32.gmra.mrb[0].mxu0 %v89
  %v254 = vpop.f32.mrb[0].mxu0
  %v255 = vadd.f32 %v170, %v254
  %v256 = vpop.f32.mrb[0].mxu0
  %257 = vmatprep.mubr.f32.mxu0 %v94
  %258 = vmatmul.mubr.f32.gmra.mrb[0].mxu0 %v93
  %v259 = vpop.f32.mrb[0].mxu0
  %v260 = vadd.f32 %v175, %v259
  %v261 = vpop.f32.mrb[0].mxu0
  %262 = vmatprep.mubr.f32.mxu0 %v98
  %263 = vmatmul.mubr.f32.gmra.mrb[0].mxu0 %v97
  %v264 = vpop.f32.mrb[0].mxu0
  %v265 = vadd.f32 %v180, %v264
  %v266 = vpop.f32.mrb[0].mxu0
  %267 = vmatprep.mubr.f32.mxu0 %v102
  %268 = vmatmul.mubr.f32.gmra.mrb[0].mxu0 %v101
  %v269 = vpop.f32.mrb[0].mxu0
  %v270 = vadd.f32 %v185, %v269
  %v271 = vpop.f32.mrb[0].mxu0
  %272 = vdwg.mxu0
  %v273 = vld [vmem:[%s1] sm:$0xff]
  %v274 = vld [vmem:[%s1 + $0x8] sm:$0xff]
  %v275 = vld [vmem:[%s1 + $0x10] sm:$0xff]
  %v276 = vld [vmem:[%s1 + $0x18] sm:$0xff]
  %v277 = vld [vmem:[%s1 + $0x20] sm:$0xff]
  %v278 = vld [vmem:[%s1 + $0x28] sm:$0xff]
  %v279 = vld [vmem:[%s1 + $0x30] sm:$0xff]
  %v280 = vld [vmem:[%s1 + $0x38] sm:$0xff]
  %v281 = vld [vmem:[%s1 + $0x40] sm:$0xff]
  %v282 = vld [vmem:[%s1 + $0x48] sm:$0xff]
  %v283 = vld [vmem:[%s1 + $0x50] sm:$0xff]
  %v284 = vld [vmem:[%s1 + $0x58] sm:$0xff]
  %v285 = vld [vmem:[%s1 + $0x60] sm:$0xff]
  %v286 = vld [vmem:[%s1 + $0x68] sm:$0xff]
  %v287 = vld [vmem:[%s1 + $0x70] sm:$0xff]
  %v288 = vld [vmem:[%s1 + $0x78] sm:$0xff]
  %289 = vmatprep.subr.mxu0 0.0
  %290 = vmatpush1.msra.mxu0 %v23
  %291 = vmatprep.subr.mxu0 0.0
  %292 = vmatpush1.msra.mxu0 %v24
  %293 = vmatprep.subr.mxu0 0.0
  %294 = vmatpush1.msra.mxu0 %v25
  %295 = vmatprep.subr.mxu0 0.0
  %296 = vmatpush1.msra.mxu0 %v26
  %297 = vmatprep.subr.mxu0 0.0
  %298 = vmatpush1.msra.mxu0 %v27
  %299 = vmatprep.subr.mxu0 0.0
  %300 = vmatpush1.msra.mxu0 %v28
  %301 = vmatprep.subr.mxu0 0.0
  %302 = vmatpush1.msra.mxu0 %v29
  %303 = vmatprep.subr.mxu0 0.0
  %304 = vmatpush1.msra.mxu0 %v30
  %305 = vmatprep.subr.mxu0 0.0
  %306 = vmatpush1.msra.mxu0 %v31
  %307 = vmatprep.subr.mxu0 0.0
  %308 = vmatpush1.msra.mxu0 %v32
  %309 = vmatprep.subr.mxu0 0.0
  %310 = vmatpush1.msra.mxu0 %v33
  %311 = vmatprep.subr.mxu0 0.0
  %312 = vmatpush1.msra.mxu0 %v34
  %313 = vmatprep.subr.mxu0 0.0
  %314 = vmatpush1.msra.mxu0 %v35
  %315 = vmatprep.subr.mxu0 0.0
  %316 = vmatpush1.msra.mxu0 %v36
  %317 = vmatprep.subr.mxu0 0.0
  %318 = vmatpush1.msra.mxu0 %v37
  %319 = vmatprep.subr.mxu0 0.0
  %320 = vmatpush1.msra.mxu0 %v38
  %321 = vmatprep.subr.mxu0 0.0
  %322 = vmatpush1.msra.mxu0 %v39
  %323 = vmatprep.subr.mxu0 0.0
  %324 = vmatpush1.msra.mxu0 %v40
  %325 = vmatprep.subr.mxu0 0.0
  %326 = vmatpush1.msra.mxu0 %v41
  %327 = vmatprep.subr.mxu0 0.0
  %328 = vmatpush1.msra.mxu0 %v42
  %329 = vmatprep.subr.mxu0 0.0
  %330 = vmatpush1.msra.mxu0 %v43
  %331 = vmatprep.subr.mxu0 0.0
  %332 = vmatpush1.msra.mxu0 %v44
  %333 = vmatprep.subr.mxu0 0.0
  %334 = vmatpush1.msra.mxu0 %v45
  %335 = vmatprep.subr.mxu0 0.0
  %336 = vmatpush1.msra.mxu0 %v46
  %337 = vmatprep.subr.mxu0 0.0
  %338 = vmatpush1.msra.mxu0 %v47
  %339 = vmatprep.subr.mxu0 0.0
  %340 = vmatpush1.msra.mxu0 %v48
  %341 = vmatprep.subr.mxu0 0.0
  %342 = vmatpush1.msra.mxu0 %v49
  %343 = vmatprep.subr.mxu0 0.0
  %344 = vmatpush1.msra.mxu0 %v50
  %345 = vmatprep.subr.mxu0 0.0
  %346 = vmatpush1.msra.mxu0 %v51
  %347 = vmatprep.subr.mxu0 0.0
  %348 = vmatpush1.msra.mxu0 %v52
  %349 = vmatprep.subr.mxu0 0.0
  %350 = vmatpush1.msra.mxu0 %v53
  %351 = vmatprep.subr.mxu0 0.0
  %352 = vmatpush1.msra.mxu0 %v54
  %353 = vmatprep.mubr.f32.mxu0 %v274
  %354 = vmatmul.mubr.f32.gmra.mrb[0].mxu0 %v273
  %v355 = vpop.f32.mrb[0].mxu0
  %v356 = vadd.f32 0.0, %v355
  %v357 = vpop.f32.mrb[0].mxu0
  %358 = vmatprep.mubr.f32.mxu0 %v278
  %359 = vmatmul.mubr.f32.gmra.mrb[0].mxu0 %v277
  %v360 = vpop.f32.mrb[0].mxu0
  %v361 = vadd.f32 0.0, %v360
  %v362 = vpop.f32.mrb[0].mxu0
  %363 = vmatprep.mubr.f32.mxu0 %v282
  %364 = vmatmul.mubr.f32.gmra.mrb[0].mxu0 %v281
  %v365 = vpop.f32.mrb[0].mxu0
  %v366 = vadd.f32 0.0, %v365
  %v367 = vpop.f32.mrb[0].mxu0
  %368 = vmatprep.mubr.f32.mxu0 %v286
  %369 = vmatmul.mubr.f32.gmra.mrb[0].mxu0 %v285
  %v370 = vpop.f32.mrb[0].mxu0
  %v371 = vadd.f32 0.0, %v370
  %v372 = vpop.f32.mrb[0].mxu0
  %373 = vdwg.mxu0
  %374 = vmatprep.subr.mxu0 0.0
  %375 = vmatpush1.msra.mxu0 %v55
  %376 = vmatprep.subr.mxu0 0.0
  %377 = vmatpush1.msra.mxu0 %v56
  %378 = vmatprep.subr.mxu0 0.0
  %379 = vmatpush1.msra.mxu0 %v57
  %380 = vmatprep.subr.mxu0 0.0
  %381 = vmatpush1.msra.mxu0 %v58
  %382 = vmatprep.subr.mxu0 0.0
  %383 = vmatpush1.msra.mxu0 %v59
  %384 = vmatprep.subr.mxu0 0.0
  %385 = vmatpush1.msra.mxu0 %v60
  %386 = vmatprep.subr.mxu0 0.0
  %387 = vmatpush1.msra.mxu0 %v61
  %388 = vmatprep.subr.mxu0 0.0
  %389 = vmatpush1.msra.mxu0 %v62
  %390 = vmatprep.subr.mxu0 0.0
  %391 = vmatpush1.msra.mxu0 %v63
  %392 = vmatprep.subr.mxu0 0.0
  %393 = vmatpush1.msra.mxu0 %v64
  %394 = vmatprep.subr.mxu0 0.0
  %395 = vmatpush1.msra.mxu0 %v65
  %396 = vmatprep.subr.mxu0 0.0
  %397 = vmatpush1.msra.mxu0 %v66
  %398 = vmatprep.subr.mxu0 0.0
  %399 = vmatpush1.msra.mxu0 %v67
  %400 = vmatprep.subr.mxu0 0.0
  %401 = vmatpush1.msra.mxu0 %v68
  %402 = vmatprep.subr.mxu0 0.0
  %403 = vmatpush1.msra.mxu0 %v69
  %404 = vmatprep.subr.mxu0 0.0
  %405 = vmatpush1.msra.mxu0 %v70
  %406 = vmatprep.subr.mxu0 0.0
  %407 = vmatpush1.msra.mxu0 %v71
  %408 = vmatprep.subr.mxu0 0.0
  %409 = vmatpush1.msra.mxu0 %v72
  %410 = vmatprep.subr.mxu0 0.0
  %411 = vmatpush1.msra.mxu0 %v73
  %412 = vmatprep.subr.mxu0 0.0
  %413 = vmatpush1.msra.mxu0 %v74
  %414 = vmatprep.subr.mxu0 0.0
  %415 = vmatpush1.msra.mxu0 %v75
  %416 = vmatprep.subr.mxu0 0.0
  %417 = vmatpush1.msra.mxu0 %v76
  %418 = vmatprep.subr.mxu0 0.0
  %419 = vmatpush1.msra.mxu0 %v77
  %420 = vmatprep.subr.mxu0 0.0
  %421 = vmatpush1.msra.mxu0 %v78
  %422 = vmatprep.subr.mxu0 0.0
  %423 = vmatpush1.msra.mxu0 %v79
  %424 = vmatprep.subr.mxu0 0.0
  %425 = vmatpush1.msra.mxu0 %v80
  %426 = vmatprep.subr.mxu0 0.0
  %427 = vmatpush1.msra.mxu0 %v81
  %428 = vmatprep.subr.mxu0 0.0
  %429 = vmatpush1.msra.mxu0 %v82
  %430 = vmatprep.subr.mxu0 0.0
  %431 = vmatpush1.msra.mxu0 %v83
  %432 = vmatprep.subr.mxu0 0.0
  %433 = vmatpush1.msra.mxu0 %v84
  %434 = vmatprep.subr.mxu0 0.0
  %435 = vmatpush1.msra.mxu0 %v85
  %436 = vmatprep.subr.mxu0 0.0
  %437 = vmatpush1.msra.mxu0 %v86
  %438 = vmatprep.mubr.f32.mxu0 %v276
  %439 = vmatmul.mubr.f32.gmra.mrb[0].mxu0 %v275
  %v440 = vpop.f32.mrb[0].mxu0
  %v441 = vadd.f32 %v356, %v440
  %v442 = vpop.f32.mrb[0].mxu0
  %443 = vmatprep.mubr.f32.mxu0 %v280
  %444 = vmatmul.mubr.f32.gmra.mrb[0].mxu0 %v279
  %v445 = vpop.f32.mrb[0].mxu0
  %v446 = vadd.f32 %v361, %v445
  %v447 = vpop.f32.mrb[0].mxu0
  %448 = vmatprep.mubr.f32.mxu0 %v284
  %449 = vmatmul.mubr.f32.gmra.mrb[0].mxu0 %v283
  %v450 = vpop.f32.mrb[0].mxu0
  %v451 = vadd.f32 %v366, %v450
  %v452 = vpop.f32.mrb[0].mxu0
  %453 = vmatprep.mubr.f32.mxu0 %v288
  %454 = vmatmul.mubr.f32.gmra.mrb[0].mxu0 %v287
  %v455 = vpop.f32.mrb[0].mxu0
  %v456 = vadd.f32 %v371, %v455
  %v457 = vpop.f32.mrb[0].mxu0
  %458 = vdwg.mxu0
  %v459 = vld [vmem:[%s2] sm:$0xff]
  %v460 = vld [vmem:[%s2 + $0x8] sm:$0xff]
  %v461 = vld [vmem:[%s2 + $0x10] sm:$0xff]
  %v462 = vld [vmem:[%s2 + $0x18] sm:$0xff]
  %v463 = vld [vmem:[%s2 + $0x20] sm:$0xff]
  %v464 = vld [vmem:[%s2 + $0x28] sm:$0xff]
  %v465 = vld [vmem:[%s2 + $0x30] sm:$0xff]
  %v466 = vld [vmem:[%s2 + $0x38] sm:$0xff]
  %v467 = vld [vmem:[%s2 + $0x40] sm:$0xff]
  %v468 = vld [vmem:[%s2 + $0x48] sm:$0xff]
  %v469 = vld [vmem:[%s2 + $0x50] sm:$0xff]
  %v470 = vld [vmem:[%s2 + $0x58] sm:$0xff]
  %v471 = vld [vmem:[%s2 + $0x60] sm:$0xff]
  %v472 = vld [vmem:[%s2 + $0x68] sm:$0xff]
  %v473 = vld [vmem:[%s2 + $0x70] sm:$0xff]
  %v474 = vld [vmem:[%s2 + $0x78] sm:$0xff]
  %475 = vmatprep.subr.mxu0 0.0
  %476 = vmatpush1.msra.mxu0 %v23
  %477 = vmatprep.subr.mxu0 0.0
  %478 = vmatpush1.msra.mxu0 %v24
  %479 = vmatprep.subr.mxu0 0.0
  %480 = vmatpush1.msra.mxu0 %v25
  %481 = vmatprep.subr.mxu0 0.0
  %482 = vmatpush1.msra.mxu0 %v26
  %483 = vmatprep.subr.mxu0 0.0
  %484 = vmatpush1.msra.mxu0 %v27
  %485 = vmatprep.subr.mxu0 0.0
  %486 = vmatpush1.msra.mxu0 %v28
  %487 = vmatprep.subr.mxu0 0.0
  %488 = vmatpush1.msra.mxu0 %v29
  %489 = vmatprep.subr.mxu0 0.0
  %490 = vmatpush1.msra.mxu0 %v30
  %491 = vmatprep.subr.mxu0 0.0
  %492 = vmatpush1.msra.mxu0 %v31
  %493 = vmatprep.subr.mxu0 0.0
  %494 = vmatpush1.msra.mxu0 %v32
  %495 = vmatprep.subr.mxu0 0.0
  %496 = vmatpush1.msra.mxu0 %v33
  %497 = vmatprep.subr.mxu0 0.0
  %498 = vmatpush1.msra.mxu0 %v34
  %499 = vmatprep.subr.mxu0 0.0
  %500 = vmatpush1.msra.mxu0 %v35
  %501 = vmatprep.subr.mxu0 0.0
  %502 = vmatpush1.msra.mxu0 %v36
  %503 = vmatprep.subr.mxu0 0.0
  %504 = vmatpush1.msra.mxu0 %v37
  %505 = vmatprep.subr.mxu0 0.0
  %506 = vmatpush1.msra.mxu0 %v38
  %507 = vmatprep.subr.mxu0 0.0
  %508 = vmatpush1.msra.mxu0 %v39
  %509 = vmatprep.subr.mxu0 0.0
  %510 = vmatpush1.msra.mxu0 %v40
  %511 = vmatprep.subr.mxu0 0.0
  %512 = vmatpush1.msra.mxu0 %v41
  %513 = vmatprep.subr.mxu0 0.0
  %514 = vmatpush1.msra.mxu0 %v42
  %515 = vmatprep.subr.mxu0 0.0
  %516 = vmatpush1.msra.mxu0 %v43
  %517 = vmatprep.subr.mxu0 0.0
  %518 = vmatpush1.msra.mxu0 %v44
  %519 = vmatprep.subr.mxu0 0.0
  %520 = vmatpush1.msra.mxu0 %v45
  %521 = vmatprep.subr.mxu0 0.0
  %522 = vmatpush1.msra.mxu0 %v46
  %523 = vmatprep.subr.mxu0 0.0
  %524 = vmatpush1.msra.mxu0 %v47
  %525 = vmatprep.subr.mxu0 0.0
  %526 = vmatpush1.msra.mxu0 %v48
  %527 = vmatprep.subr.mxu0 0.0
  %528 = vmatpush1.msra.mxu0 %v49
  %529 = vmatprep.subr.mxu0 0.0
  %530 = vmatpush1.msra.mxu0 %v50
  %531 = vmatprep.subr.mxu0 0.0
  %532 = vmatpush1.msra.mxu0 %v51
  %533 = vmatprep.subr.mxu0 0.0
  %534 = vmatpush1.msra.mxu0 %v52
  %535 = vmatprep.subr.mxu0 0.0
  %536 = vmatpush1.msra.mxu0 %v53
  %537 = vmatprep.subr.mxu0 0.0
  %538 = vmatpush1.msra.mxu0 %v54
  %539 = vmatprep.mubr.f32.mxu0 %v460
  %540 = vmatmul.mubr.f32.gmra.mrb[0].mxu0 %v459
  %v541 = vpop.f32.mrb[0].mxu0
  %v542 = vadd.f32 0.0, %v541
  %v543 = vpop.f32.mrb[0].mxu0
  %544 = vmatprep.mubr.f32.mxu0 %v464
  %545 = vmatmul.mubr.f32.gmra.mrb[0].mxu0 %v463
  %v546 = vpop.f32.mrb[0].mxu0
  %v547 = vadd.f32 0.0, %v546
  %v548 = vpop.f32.mrb[0].mxu0
  %549 = vmatprep.mubr.f32.mxu0 %v468
  %550 = vmatmul.mubr.f32.gmra.mrb[0].mxu0 %v467
  %v551 = vpop.f32.mrb[0].mxu0
  %v552 = vadd.f32 0.0, %v551
  %v553 = vpop.f32.mrb[0].mxu0
  %554 = vmatprep.mubr.f32.mxu0 %v472
  %555 = vmatmul.mubr.f32.gmra.mrb[0].mxu0 %v471
  %v556 = vpop.f32.mrb[0].mxu0
  %v557 = vadd.f32 0.0, %v556
  %v558 = vpop.f32.mrb[0].mxu0
  %559 = vdwg.mxu0
  %560 = vmatprep.subr.mxu0 0.0
  %561 = vmatpush1.msra.mxu0 %v55
  %562 = vmatprep.subr.mxu0 0.0
  %563 = vmatpush1.msra.mxu0 %v56
  %564 = vmatprep.subr.mxu0 0.0
  %565 = vmatpush1.msra.mxu0 %v57
  %566 = vmatprep.subr.mxu0 0.0
  %567 = vmatpush1.msra.mxu0 %v58
  %568 = vmatprep.subr.mxu0 0.0
  %569 = vmatpush1.msra.mxu0 %v59
  %570 = vmatprep.subr.mxu0 0.0
  %571 = vmatpush1.msra.mxu0 %v60
  %572 = vmatprep.subr.mxu0 0.0
  %573 = vmatpush1.msra.mxu0 %v61
  %574 = vmatprep.subr.mxu0 0.0
  %575 = vmatpush1.msra.mxu0 %v62
  %576 = vmatprep.subr.mxu0 0.0
  %577 = vmatpush1.msra.mxu0 %v63
  %578 = vmatprep.subr.mxu0 0.0
  %579 = vmatpush1.msra.mxu0 %v64
  %580 = vmatprep.subr.mxu0 0.0
  %581 = vmatpush1.msra.mxu0 %v65
  %582 = vmatprep.subr.mxu0 0.0
  %583 = vmatpush1.msra.mxu0 %v66
  %584 = vmatprep.subr.mxu0 0.0
  %585 = vmatpush1.msra.mxu0 %v67
  %586 = vmatprep.subr.mxu0 0.0
  %587 = vmatpush1.msra.mxu0 %v68
  %588 = vmatprep.subr.mxu0 0.0
  %589 = vmatpush1.msra.mxu0 %v69
  %590 = vmatprep.subr.mxu0 0.0
  %591 = vmatpush1.msra.mxu0 %v70
  %592 = vmatprep.subr.mxu0 0.0
  %593 = vmatpush1.msra.mxu0 %v71
  %594 = vmatprep.subr.mxu0 0.0
  %595 = vmatpush1.msra.mxu0 %v72
  %596 = vmatprep.subr.mxu0 0.0
  %597 = vmatpush1.msra.mxu0 %v73
  %598 = vmatprep.subr.mxu0 0.0
  %599 = vmatpush1.msra.mxu0 %v74
  %600 = vmatprep.subr.mxu0 0.0
  %601 = vmatpush1.msra.mxu0 %v75
  %602 = vmatprep.subr.mxu0 0.0
  %603 = vmatpush1.msra.mxu0 %v76
  %604 = vmatprep.subr.mxu0 0.0
  %605 = vmatpush1.msra.mxu0 %v77
  %606 = vmatprep.subr.mxu0 0.0
  %607 = vmatpush1.msra.mxu0 %v78
  %608 = vmatprep.subr.mxu0 0.0
  %609 = vmatpush1.msra.mxu0 %v79
  %610 = vmatprep.subr.mxu0 0.0
  %611 = vmatpush1.msra.mxu0 %v80
  %612 = vmatprep.subr.mxu0 0.0
  %613 = vmatpush1.msra.mxu0 %v81
  %614 = vmatprep.subr.mxu0 0.0
  %615 = vmatpush1.msra.mxu0 %v82
  %616 = vmatprep.subr.mxu0 0.0
  %617 = vmatpush1.msra.mxu0 %v83
  %618 = vmatprep.subr.mxu0 0.0
  %619 = vmatpush1.msra.mxu0 %v84
  %620 = vmatprep.subr.mxu0 0.0
  %621 = vmatpush1.msra.mxu0 %v85
  %622 = vmatprep.subr.mxu0 0.0
  %623 = vmatpush1.msra.mxu0 %v86
  %624 = vmatprep.mubr.f32.mxu0 %v462
  %625 = vmatmul.mubr.f32.gmra.mrb[0].mxu0 %v461
  %v626 = vpop.f32.mrb[0].mxu0
  %v627 = vadd.f32 %v542, %v626
  %v628 = vpop.f32.mrb[0].mxu0
  %629 = vmatprep.mubr.f32.mxu0 %v466
  %630 = vmatmul.mubr.f32.gmra.mrb[0].mxu0 %v465
  %v631 = vpop.f32.mrb[0].mxu0
  %v632 = vadd.f32 %v547, %v631
  %v633 = vpop.f32.mrb[0].mxu0
  %634 = vmatprep.mubr.f32.mxu0 %v470
  %635 = vmatmul.mubr.f32.gmra.mrb[0].mxu0 %v469
  %v636 = vpop.f32.mrb[0].mxu0
  %v637 = vadd.f32 %v552, %v636
  %v638 = vpop.f32.mrb[0].mxu0
  %639 = vmatprep.mubr.f32.mxu0 %v474
  %640 = vmatmul.mubr.f32.gmra.mrb[0].mxu0 %v473
  %v641 = vpop.f32.mrb[0].mxu0
  %v642 = vadd.f32 %v557, %v641
  %v643 = vpop.f32.mrb[0].mxu0
  %644 = vdwg.mxu0
  %v645 = vld [vmem:[%s3] sm:$0xff]
  %v646 = vld [vmem:[%s3 + $0x8] sm:$0xff]
  %v647 = vld [vmem:[%s3 + $0x10] sm:$0xff]
  %v648 = vld [vmem:[%s3 + $0x18] sm:$0xff]
  %v649 = vld [vmem:[%s3 + $0x20] sm:$0xff]
  %v650 = vld [vmem:[%s3 + $0x28] sm:$0xff]
  %v651 = vld [vmem:[%s3 + $0x30] sm:$0xff]
  %v652 = vld [vmem:[%s3 + $0x38] sm:$0xff]
  %v653 = vld [vmem:[%s3 + $0x40] sm:$0xff]
  %v654 = vld [vmem:[%s3 + $0x48] sm:$0xff]
  %v655 = vld [vmem:[%s3 + $0x50] sm:$0xff]
  %v656 = vld [vmem:[%s3 + $0x58] sm:$0xff]
  %v657 = vld [vmem:[%s3 + $0x60] sm:$0xff]
  %v658 = vld [vmem:[%s3 + $0x68] sm:$0xff]
  %v659 = vld [vmem:[%s3 + $0x70] sm:$0xff]
  %v660 = vld [vmem:[%s3 + $0x78] sm:$0xff]
  %661 = vmatprep.subr.mxu0 0.0
  %662 = vmatpush1.msra.mxu0 %v23
  %663 = vmatprep.subr.mxu0 0.0
  %664 = vmatpush1.msra.mxu0 %v24
  %665 = vmatprep.subr.mxu0 0.0
  %666 = vmatpush1.msra.mxu0 %v25
  %667 = vmatprep.subr.mxu0 0.0
  %668 = vmatpush1.msra.mxu0 %v26
  %669 = vmatprep.subr.mxu0 0.0
  %670 = vmatpush1.msra.mxu0 %v27
  %671 = vmatprep.subr.mxu0 0.0
  %672 = vmatpush1.msra.mxu0 %v28
  %673 = vmatprep.subr.mxu0 0.0
  %674 = vmatpush1.msra.mxu0 %v29
  %675 = vmatprep.subr.mxu0 0.0
  %676 = vmatpush1.msra.mxu0 %v30
  %677 = vmatprep.subr.mxu0 0.0
  %678 = vmatpush1.msra.mxu0 %v31
  %679 = vmatprep.subr.mxu0 0.0
  %680 = vmatpush1.msra.mxu0 %v32
  %681 = vmatprep.subr.mxu0 0.0
  %682 = vmatpush1.msra.mxu0 %v33
  %683 = vmatprep.subr.mxu0 0.0
  %684 = vmatpush1.msra.mxu0 %v34
  %685 = vmatprep.subr.mxu0 0.0
  %686 = vmatpush1.msra.mxu0 %v35
  %687 = vmatprep.subr.mxu0 0.0
  %688 = vmatpush1.msra.mxu0 %v36
  %689 = vmatprep.subr.mxu0 0.0
  %690 = vmatpush1.msra.mxu0 %v37
  %691 = vmatprep.subr.mxu0 0.0
  %692 = vmatpush1.msra.mxu0 %v38
  %693 = vmatprep.subr.mxu0 0.0
  %694 = vmatpush1.msra.mxu0 %v39
  %695 = vmatprep.subr.mxu0 0.0
  %696 = vmatpush1.msra.mxu0 %v40
  %697 = vmatprep.subr.mxu0 0.0
  %698 = vmatpush1.msra.mxu0 %v41
  %699 = vmatprep.subr.mxu0 0.0
  %700 = vmatpush1.msra.mxu0 %v42
  %701 = vmatprep.subr.mxu0 0.0
  %702 = vmatpush1.msra.mxu0 %v43
  %703 = vmatprep.subr.mxu0 0.0
  %704 = vmatpush1.msra.mxu0 %v44
  %705 = vmatprep.subr.mxu0 0.0
  %706 = vmatpush1.msra.mxu0 %v45
  %707 = vmatprep.subr.mxu0 0.0
  %708 = vmatpush1.msra.mxu0 %v46
  %709 = vmatprep.subr.mxu0 0.0
  %710 = vmatpush1.msra.mxu0 %v47
  %711 = vmatprep.subr.mxu0 0.0
  %712 = vmatpush1.msra.mxu0 %v48
  %713 = vmatprep.subr.mxu0 0.0
  %714 = vmatpush1.msra.mxu0 %v49
  %715 = vmatprep.subr.mxu0 0.0
  %716 = vmatpush1.msra.mxu0 %v50
  %717 = vmatprep.subr.mxu0 0.0
  %718 = vmatpush1.msra.mxu0 %v51
  %719 = vmatprep.subr.mxu0 0.0
  %720 = vmatpush1.msra.mxu0 %v52
  %721 = vmatprep.subr.mxu0 0.0
  %722 = vmatpush1.msra.mxu0 %v53
  %723 = vmatprep.subr.mxu0 0.0
  %724 = vmatpush1.msra.mxu0 %v54
  %725 = vmatprep.mubr.f32.mxu0 %v646
  %726 = vmatmul.mubr.f32.gmra.mrb[0].mxu0 %v645
  %v727 = vpop.f32.mrb[0].mxu0
  %v728 = vadd.f32 0.0, %v727
  %v729 = vpop.f32.mrb[0].mxu0
  %730 = vmatprep.mubr.f32.mxu0 %v650
  %731 = vmatmul.mubr.f32.gmra.mrb[0].mxu0 %v649
  %v732 = vpop.f32.mrb[0].mxu0
  %v733 = vadd.f32 0.0, %v732
  %v734 = vpop.f32.mrb[0].mxu0
  %735 = vmatprep.mubr.f32.mxu0 %v654
  %736 = vmatmul.mubr.f32.gmra.mrb[0].mxu0 %v653
  %v737 = vpop.f32.mrb[0].mxu0
  %v738 = vadd.f32 0.0, %v737
  %v739 = vpop.f32.mrb[0].mxu0
  %740 = vmatprep.mubr.f32.mxu0 %v658
  %741 = vmatmul.mubr.f32.gmra.mrb[0].mxu0 %v657
  %v742 = vpop.f32.mrb[0].mxu0
  %v743 = vadd.f32 0.0, %v742
  %v744 = vpop.f32.mrb[0].mxu0
  %745 = vdwg.mxu0
  %746 = vmatprep.subr.mxu0 0.0
  %747 = vmatpush1.msra.mxu0 %v55
  %748 = vmatprep.subr.mxu0 0.0
  %749 = vmatpush1.msra.mxu0 %v56
  %750 = vmatprep.subr.mxu0 0.0
  %751 = vmatpush1.msra.mxu0 %v57
  %752 = vmatprep.subr.mxu0 0.0
  %753 = vmatpush1.msra.mxu0 %v58
  %754 = vmatprep.subr.mxu0 0.0
  %755 = vmatpush1.msra.mxu0 %v59
  %756 = vmatprep.subr.mxu0 0.0
  %757 = vmatpush1.msra.mxu0 %v60
  %758 = vmatprep.subr.mxu0 0.0
  %759 = vmatpush1.msra.mxu0 %v61
  %760 = vmatprep.subr.mxu0 0.0
  %761 = vmatpush1.msra.mxu0 %v62
  %762 = vmatprep.subr.mxu0 0.0
  %763 = vmatpush1.msra.mxu0 %v63
  %764 = vmatprep.subr.mxu0 0.0
  %765 = vmatpush1.msra.mxu0 %v64
  %766 = vmatprep.subr.mxu0 0.0
  %767 = vmatpush1.msra.mxu0 %v65
  %768 = vmatprep.subr.mxu0 0.0
  %769 = vmatpush1.msra.mxu0 %v66
  %770 = vmatprep.subr.mxu0 0.0
  %771 = vmatpush1.msra.mxu0 %v67
  %772 = vmatprep.subr.mxu0 0.0
  %773 = vmatpush1.msra.mxu0 %v68
  %774 = vmatprep.subr.mxu0 0.0
  %775 = vmatpush1.msra.mxu0 %v69
  %776 = vmatprep.subr.mxu0 0.0
  %777 = vmatpush1.msra.mxu0 %v70
  %778 = vmatprep.subr.mxu0 0.0
  %779 = vmatpush1.msra.mxu0 %v71
  %780 = vmatprep.subr.mxu0 0.0
  %781 = vmatpush1.msra.mxu0 %v72
  %782 = vmatprep.subr.mxu0 0.0
  %783 = vmatpush1.msra.mxu0 %v73
  %784 = vmatprep.subr.mxu0 0.0
  %785 = vmatpush1.msra.mxu0 %v74
  %786 = vmatprep.subr.mxu0 0.0
  %787 = vmatpush1.msra.mxu0 %v75
  %788 = vmatprep.subr.mxu0 0.0
  %789 = vmatpush1.msra.mxu0 %v76
  %790 = vmatprep.subr.mxu0 0.0
  %791 = vmatpush1.msra.mxu0 %v77
  %792 = vmatprep.subr.mxu0 0.0
  %793 = vmatpush1.msra.mxu0 %v78
  %794 = vmatprep.subr.mxu0 0.0
  %795 = vmatpush1.msra.mxu0 %v79
  %796 = vmatprep.subr.mxu0 0.0
  %797 = vmatpush1.msra.mxu0 %v80
  %798 = vmatprep.subr.mxu0 0.0
  %799 = vmatpush1.msra.mxu0 %v81
  %800 = vmatprep.subr.mxu0 0.0
  %801 = vmatpush1.msra.mxu0 %v82
  %802 = vmatprep.subr.mxu0 0.0
  %803 = vmatpush1.msra.mxu0 %v83
  %804 = vmatprep.subr.mxu0 0.0
  %805 = vmatpush1.msra.mxu0 %v84
  %806 = vmatprep.subr.mxu0 0.0
  %807 = vmatpush1.msra.mxu0 %v85
  %808 = vmatprep.subr.mxu0 0.0
  %809 = vmatpush1.msra.mxu0 %v86
  %810 = vmatprep.mubr.f32.mxu0 %v648
  %811 = vmatmul.mubr.f32.gmra.mrb[0].mxu0 %v647
  %v812 = vpop.f32.mrb[0].mxu0
  %v813 = vadd.f32 %v728, %v812
  %v814 = vpop.f32.mrb[0].mxu0
  %815 = vmatprep.mubr.f32.mxu0 %v652
  %816 = vmatmul.mubr.f32.gmra.mrb[0].mxu0 %v651
  %v817 = vpop.f32.mrb[0].mxu0
  %v818 = vadd.f32 %v733, %v817
  %v819 = vpop.f32.mrb[0].mxu0
  %820 = vmatprep.mubr.f32.mxu0 %v656
  %821 = vmatmul.mubr.f32.gmra.mrb[0].mxu0 %v655
  %v822 = vpop.f32.mrb[0].mxu0
  %v823 = vadd.f32 %v738, %v822
  %v824 = vpop.f32.mrb[0].mxu0
  %825 = vmatprep.mubr.f32.mxu0 %v660
  %826 = vmatmul.mubr.f32.gmra.mrb[0].mxu0 %v659
  %v827 = vpop.f32.mrb[0].mxu0
  %v828 = vadd.f32 %v743, %v827
  %v829 = vpop.f32.mrb[0].mxu0
  %830 = vdwg.mxu0
  %v831 = vmax.f32 %v255, %v441
  %v832 = vmax.f32 %v260, %v446
  %v833 = vmax.f32 %v265, %v451
  %v834 = vmax.f32 %v270, %v456
  %v835 = vmax.f32 %v627, %v813
  %v836 = vmax.f32 %v632, %v818
  %v837 = vmax.f32 %v637, %v823
  %v838 = vmax.f32 %v642, %v828
  %v839 = vmax.f32 %v831, %v835
  %v840 = vmax.f32 %v832, %v836
  %v841 = vmax.f32 %v833, %v837
  %v842 = vmax.f32 %v834, %v838
  %v843 = vld [vmem:[%s5] sm:$0x1]
  %v845 = vlaneseq
  %v846 = vshrl.u32 %v845, 7
  %v847 = vsub.s32 0, %v846
  %v848 = vrot.slane %v843, %v847
  %v850 = vadd.f32 %v839, %v848
  %v851 = vadd.f32 %v840, %v848
  %v852 = vadd.f32 %v841, %v848
  %v853 = vadd.f32 %v842, %v848
  %v854 = vmax.f32 %v850, 0.0
  %v855 = vmax.f32 %v851, 0.0
  %v856 = vmax.f32 %v852, 0.0
  %v857 = vmax.f32 %v853, 0.0
  %858 = vst [vmem:[%s6] sm:$0xff] %v854
  %859 = vst [vmem:[%s6 + $0x8] sm:$0xff] %v855
  %860 = vst [vmem:[%s6 + $0x10] sm:$0xff] %v856
  %861 = vst [vmem:[%s6 + $0x18] sm:$0xff] %v857
  // Predicated region
  $region26: #{cnn_forward.4} parent=0 // pred_check
    _
  $region27: #{cnn_forward.4} parent=0 // pred_check_branch
    %863 = sbr.rel (0) target = $region29
  $region28: #{cnn_forward.4} parent=0 // pred_region
    _
  $region29: #{cnn_forward.4} parent=0 // pred_fallthru
    _
  // Predicated region
  $region30: #{cnn_forward.4} parent=0 // pred_check
    _
  $region31: #{cnn_forward.4} parent=0 // pred_check_branch
    %865 = sbr.rel (0) target = $region33
  $region32: #{cnn_forward.4} parent=0 // pred_region
    _
  $region33: #{cnn_forward.4} parent=0 // pred_fallthru
    _

</llo_original>
